<compile_context>
chip_gen: v5e
topology: v5e:2x2
jax: 0.10.0
libtpu: 0.0.40
codegen_flags: <defaults>
</compile_context>

<pallas_src>
import jax
import jax.numpy as jnp
from jax.experimental import pallas as pl
from jax.experimental.pallas import tpu as pltpu

CHANNELS = 1
IMG_SIZE = 32
IN_FEATURES = CHANNELS * IMG_SIZE * IMG_SIZE  # 1024
H1 = 512
H2 = 256
OUT = 1
LEAKY_SLOPE = 0.2


def _round_up(n, m):
    return ((n + m - 1) // m) * m


def _leaky_relu_f32(x, slope=LEAKY_SLOPE):
    return jnp.where(x > 0, x, slope * x)


def _choose_tile_b(b):
    """Pick the batch tile size.

    Small batches: one grid step covering the whole (sublane-padded) batch.
    Large batches: 128-aligned MXU M tiles, capped at 1024, with at least two
    grid steps so the "parallel" axis can shard across both v7x TensorCores.
    """
    padded8 = _round_up(b, 8)
    if padded8 <= 256:
        return padded8
    half = _round_up(b, 128) // 2
    return max(128, min(1024, (half // 128) * 128))


def discriminator_kernel(x_ref, w1_ref, b1_ref, w2_ref, b2_ref, w3_ref, b3_ref,
                         o_ref):
    # Cast to bf16 in-kernel (input stays f32 in HBM; no wrapper cast pass).
    x = x_ref[...].astype(jnp.bfloat16)

    # ---- Linear1 + LeakyReLU (bf16 MXU matmul, f32 accumulate/elementwise) ----
    h = jnp.dot(x, w1_ref[...], preferred_element_type=jnp.float32)
    h = _leaky_relu_f32(h + b1_ref[...])

    # ---- Linear2 + LeakyReLU ----
    h = jnp.dot(h.astype(jnp.bfloat16), w2_ref[...],
                preferred_element_type=jnp.float32)
    h = _leaky_relu_f32(h + b2_ref[...])

    # ---- Linear3 (logit head, N=1): VPU multiply + cross-lane reduction
    #      instead of a degenerate (TB,256)@(256,1) MXU matmul. ----
    w3_row = w3_ref[...].astype(jnp.float32)             # (1, H2)
    logits = jnp.sum(h * w3_row, axis=-1) + b3_ref[0]    # (TB,) f32

    # Lane-dense store: batch lives on the lane axis of the (1, TB) output row.
    o_ref[...] = logits.reshape(1, -1).astype(o_ref.dtype)


def discriminator_forward(x, params, *, tile_b=None):
    """x: (B, C, H, W). Returns (B, 1) float32 logits."""
    b = x.shape[0]
    if tile_b is None:
        tile_b = _choose_tile_b(b)

    grid_b = (b + tile_b - 1) // tile_b   # cdiv; no input padding
    padded_b = grid_b * tile_b

    # Free view; the bf16 cast happens inside the kernel.
    x_flat = x.reshape(b, -1)

    w1, b1, w2, b2, w3, b3 = params

    out_row = pl.pallas_call(
        discriminator_kernel,
        out_shape=jax.ShapeDtypeStruct((1, padded_b), jnp.float32),
        grid_spec=pltpu.PrefetchScalarGridSpec(
            num_scalar_prefetch=0,
            grid=(grid_b,),
            in_specs=[
                # x: tiled over the batch (trailing partial tile is allowed;
                # its garbage rows are sliced off below).
                pl.BlockSpec((tile_b, IN_FEATURES), lambda i: (i, 0)),
                # weights / biases: constant index_map -> VMEM-resident
                pl.BlockSpec((IN_FEATURES, H1), lambda i: (0, 0)),
                pl.BlockSpec((1, H1), lambda i: (0, 0)),
                pl.BlockSpec((H1, H2), lambda i: (0, 0)),
                pl.BlockSpec((1, H2), lambda i: (0, 0)),
                pl.BlockSpec((1, H2), lambda i: (0, 0)),
                # b3: scalar in SMEM (no padded VMEM tile / extra DMA)
                pl.BlockSpec(memory_space=pltpu.MemorySpace.SMEM),
            ],
            # Lane-dense output: (1, tile_b) row per grid step.
            out_specs=pl.BlockSpec((1, tile_b), lambda i: (0, i)),
        ),
        compiler_params=pltpu.CompilerParams(
            dimension_semantics=("parallel",),
            vmem_limit_bytes=32 << 20,
        ),
    )(x_flat, w1, b1, w2, b2, w3, b3)

    # Transpose the lane-dense row back to the (B, 1) column the module returns.
    return out_row[0, :b].reshape(b, OUT)


def init_params(key):
    """Init matching torch.nn.Linear default (uniform +-1/sqrt(fan_in)).

    Weights stored as (in_features, out_features) in bf16 (halved HBM traffic,
    native MXU rate). Biases b1/b2 stay f32 as (1, out_features); b3 is an f32
    scalar of shape (1,) for SMEM. The head weight is a (1, 256) row vector.
    """
    ks = jax.random.split(key, 6)

    def lin(kw, kb, fan_in, fan_out):
        bound = 1.0 / jnp.sqrt(fan_in)
        w = jax.random.uniform(kw, (fan_in, fan_out), jnp.float32, -bound, bound)
        bv = jax.random.uniform(kb, (1, fan_out), jnp.float32, -bound, bound)
        return w.astype(jnp.bfloat16), bv

    w1, b1 = lin(ks[0], ks[1], IN_FEATURES, H1)
    w2, b2 = lin(ks[2], ks[3], H1, H2)
    w3_t, b3v = lin(ks[4], ks[5], H2, OUT)
    w3 = w3_t.reshape(1, H2)          # (1, 256) bf16 row
    b3 = b3v.reshape(1)               # (1,) f32 scalar for SMEM
    return (w1, b1, w2, b2, w3, b3)


def reference_forward(x, params):
    """Pure-JAX reference mirroring the kernel's numerics (bf16 matmuls, f32 acc)."""
    w1, b1, w2, b2, w3, b3 = params
    h = x.reshape(x.shape[0], -1).astype(jnp.bfloat16)
    h = jnp.dot(h, w1, preferred_element_type=jnp.float32) + b1
    h = jnp.where(h > 0, h, LEAKY_SLOPE * h)
    h = jnp.dot(h.astype(jnp.bfloat16), w2, preferred_element_type=jnp.float32) + b2
    h = jnp.where(h > 0, h, LEAKY_SLOPE * h)
    o = jnp.sum(h * w3.astype(jnp.float32), axis=-1, keepdims=True) + b3[0]
    return o


if __name__ == "__main__":
    key = jax.random.PRNGKey(0)
    k_params, k_x = jax.random.split(key)

    params = init_params(k_params)

    batch = 2
    x = jax.random.normal(k_x, (batch, CHANNELS, IMG_SIZE, IMG_SIZE), jnp.float32)

    out = discriminator_forward(x, params)
    out = jax.block_until_ready(out)

    ref = reference_forward(x, params)
    assert out.shape == (batch, OUT), out.shape
    assert jnp.allclose(out, ref, atol=5e-3, rtol=5e-3), (out, ref)

    print("KERNEL_OK")
</pallas_src>

<mosaic_0001>
module attributes {stable_mosaic.version = 11 : i64} {
  func.func @discriminator_kernel(%arg0: i32, %arg1: memref<8x1024xf32, #tpu.memory_space<vmem>>, %arg2: memref<1024x512xbf16, #tpu.memory_space<vmem>>, %arg3: memref<1x512xf32, #tpu.memory_space<vmem>>, %arg4: memref<512x256xbf16, #tpu.memory_space<vmem>>, %arg5: memref<1x256xf32, #tpu.memory_space<vmem>>, %arg6: memref<1x256xbf16, #tpu.memory_space<vmem>>, %arg7: memref<1xf32, #tpu.memory_space<smem>>, %arg8: memref<1x8xf32, #tpu.memory_space<vmem>>) attributes {dimension_semantics = [#tpu.dimension_semantics<parallel>], iteration_bounds = array<i64: 1>, scalar_prefetch = 0 : i64, scratch_operands = 0 : i64, tpu.core_type = #tpu.core_type<tc>, window_params = [{transform_indices = @transform_0, window_bounds = array<i64: 8, 1024>}, {pipeline_mode = #tpu.pipeline_mode<synchronous>, transform_indices = @transform_1, window_bounds = array<i64: 1024, 512>}, {pipeline_mode = #tpu.pipeline_mode<synchronous>, transform_indices = @transform_2, window_bounds = array<i64: 1, 512>}, {pipeline_mode = #tpu.pipeline_mode<synchronous>, transform_indices = @transform_3, window_bounds = array<i64: 512, 256>}, {pipeline_mode = #tpu.pipeline_mode<synchronous>, transform_indices = @transform_4, window_bounds = array<i64: 1, 256>}, {pipeline_mode = #tpu.pipeline_mode<synchronous>, transform_indices = @transform_5, window_bounds = array<i64: 1, 256>}, {transform_indices = @transform_6, window_bounds = array<i64: 1>}, {transform_indices = @transform_7, window_bounds = array<i64: 1, 8>}]} {
    %c0 = arith.constant 0 : index
    %c0_0 = arith.constant 0 : index
    %0 = vector.load %arg1[%c0, %c0_0] : memref<8x1024xf32, #tpu.memory_space<vmem>>, vector<8x1024xf32>
    %1 = arith.truncf %0 : vector<8x1024xf32> to vector<8x1024xbf16>
    %c0_1 = arith.constant 0 : index
    %c0_2 = arith.constant 0 : index
    %2 = vector.load %arg2[%c0_1, %c0_2] : memref<1024x512xbf16, #tpu.memory_space<vmem>>, vector<1024x512xbf16>
    %cst = arith.constant dense<0.000000e+00> : vector<8x512xf32>
    %3 = tpu.matmul %1, %2, %cst {dimension_numbers = #tpu.dot_dimension_numbers<[1], [0], [0], [1], [0, 0, 1, 1], [], []>} : vector<8x1024xbf16>, vector<1024x512xbf16>, vector<8x512xf32> -> vector<8x512xf32>
    %c0_3 = arith.constant 0 : index
    %c0_4 = arith.constant 0 : index
    %4 = vector.load %arg3[%c0_3, %c0_4] : memref<1x512xf32, #tpu.memory_space<vmem>>, vector<1x512xf32>
    %5 = vector.broadcast %4 : vector<1x512xf32> to vector<8x512xf32>
    %6 = arith.addf %3, %5 : vector<8x512xf32>
    %cst_5 = arith.constant 0.000000e+00 : f32
    %7 = vector.broadcast %cst_5 : f32 to vector<8x512xf32>
    %8 = arith.cmpf ogt, %6, %7 : vector<8x512xf32>
    %cst_6 = arith.constant 2.000000e-01 : f32
    %9 = vector.broadcast %cst_6 : f32 to vector<8x512xf32>
    %10 = arith.mulf %9, %6 : vector<8x512xf32>
    %11 = arith.select %8, %6, %10 : vector<8x512xi1>, vector<8x512xf32>
    %12 = arith.truncf %11 : vector<8x512xf32> to vector<8x512xbf16>
    %c0_7 = arith.constant 0 : index
    %c0_8 = arith.constant 0 : index
    %13 = vector.load %arg4[%c0_7, %c0_8] : memref<512x256xbf16, #tpu.memory_space<vmem>>, vector<512x256xbf16>
    %cst_9 = arith.constant dense<0.000000e+00> : vector<8x256xf32>
    %14 = tpu.matmul %12, %13, %cst_9 {dimension_numbers = #tpu.dot_dimension_numbers<[1], [0], [0], [1], [0, 0, 1, 1], [], []>} : vector<8x512xbf16>, vector<512x256xbf16>, vector<8x256xf32> -> vector<8x256xf32>
    %c0_10 = arith.constant 0 : index
    %c0_11 = arith.constant 0 : index
    %15 = vector.load %arg5[%c0_10, %c0_11] : memref<1x256xf32, #tpu.memory_space<vmem>>, vector<1x256xf32>
    %16 = vector.broadcast %15 : vector<1x256xf32> to vector<8x256xf32>
    %17 = arith.addf %14, %16 : vector<8x256xf32>
    %cst_12 = arith.constant 0.000000e+00 : f32
    %18 = vector.broadcast %cst_12 : f32 to vector<8x256xf32>
    %19 = arith.cmpf ogt, %17, %18 : vector<8x256xf32>
    %cst_13 = arith.constant 2.000000e-01 : f32
    %20 = vector.broadcast %cst_13 : f32 to vector<8x256xf32>
    %21 = arith.mulf %20, %17 : vector<8x256xf32>
    %22 = arith.select %19, %17, %21 : vector<8x256xi1>, vector<8x256xf32>
    %c0_14 = arith.constant 0 : index
    %c0_15 = arith.constant 0 : index
    %23 = vector.load %arg6[%c0_14, %c0_15] : memref<1x256xbf16, #tpu.memory_space<vmem>>, vector<1x256xbf16>
    %24 = arith.extf %23 : vector<1x256xbf16> to vector<1x256xf32>
    %25 = vector.broadcast %24 : vector<1x256xf32> to vector<8x256xf32>
    %26 = arith.mulf %22, %25 : vector<8x256xf32>
    %cst_16 = arith.constant dense<0.000000e+00> : vector<8xf32>
    %27 = vector.multi_reduction <add>, %26, %cst_16 [1] : vector<8x256xf32> to vector<8xf32>
    %c0_17 = arith.constant 0 : index
    %28 = memref.load %arg7[%c0_17] : memref<1xf32, #tpu.memory_space<smem>>
    %29 = vector.broadcast %28 : f32 to vector<8xf32>
    %30 = arith.addf %27, %29 : vector<8xf32>
    %31 = vector.shape_cast %30 : vector<8xf32> to vector<1x8xf32>
    %c0_18 = arith.constant 0 : index
    %c0_19 = arith.constant 0 : index
    %32 = vector.load %arg8[%c0_18, %c0_19] : memref<1x8xf32, #tpu.memory_space<vmem>>, vector<1x8xf32>
    tpu.vector_store %arg8[%c0_18, %c0_19], %31 {strides = array<i32>} : memref<1x8xf32, #tpu.memory_space<vmem>>, vector<1x8xf32>,
    return
  }
  func.func @transform_0(%arg0: i32) -> (i32, i32) {
    %c0_i32 = arith.constant 0 : i32
    %c0_i32_0 = arith.constant 0 : i32
    return %arg0, %c0_i32 : i32, i32
  }
  func.func @transform_1(%arg0: i32) -> (i32, i32) {
    %c0_i32 = arith.constant 0 : i32
    %c0_i32_0 = arith.constant 0 : i32
    %c0_i32_1 = arith.constant 0 : i32
    return %c0_i32, %c0_i32_0 : i32, i32
  }
  func.func @transform_2(%arg0: i32) -> (i32, i32) {
    %c0_i32 = arith.constant 0 : i32
    %c0_i32_0 = arith.constant 0 : i32
    %c0_i32_1 = arith.constant 0 : i32
    return %c0_i32, %c0_i32_0 : i32, i32
  }
  func.func @transform_3(%arg0: i32) -> (i32, i32) {
    %c0_i32 = arith.constant 0 : i32
    %c0_i32_0 = arith.constant 0 : i32
    %c0_i32_1 = arith.constant 0 : i32
    return %c0_i32, %c0_i32_0 : i32, i32
  }
  func.func @transform_4(%arg0: i32) -> (i32, i32) {
    %c0_i32 = arith.constant 0 : i32
    %c0_i32_0 = arith.constant 0 : i32
    %c0_i32_1 = arith.constant 0 : i32
    return %c0_i32, %c0_i32_0 : i32, i32
  }
  func.func @transform_5(%arg0: i32) -> (i32, i32) {
    %c0_i32 = arith.constant 0 : i32
    %c0_i32_0 = arith.constant 0 : i32
    %c0_i32_1 = arith.constant 0 : i32
    return %c0_i32, %c0_i32_0 : i32, i32
  }
  func.func @transform_6(%arg0: i32) -> i32 {
    %c0_i32 = arith.constant 0 : i32
    %c0_i32_0 = arith.constant 0 : i32
    return %c0_i32 : i32
  }
  func.func @transform_7(%arg0: i32) -> (i32, i32) {
    %c0_i32 = arith.constant 0 : i32
    %c0_i32_0 = arith.constant 0 : i32
    return %c0_i32, %arg0 : i32, i32
  }
}

</mosaic_0001>

<llo_original>
// kernel: tpu_custom_call.1
$region0: #{tpu_custom_call.1}
  #allocation0 [shape = 'u32[]', space=smem, size = 0x4, offset = 0x4, fixed_abs, tag = 'smem constant byte address 0x4 - core index']
  #allocation1 [shape = 'u32[72,128]{1,0:T(1,128)}', space=vmem, size = 0x9000, scoped, tag = 'internal scratch']
  #allocation2 [shape = 'f32[1]{0:T(128)S(6)}', space=smem, size = 0x200, scoped, tag = 'scoped memory for tpu_custom_call.1']
  %s0 = inlined_call_operand.hbm [shape: f32[2,1024], index: 0, kind: input, shape index: {}]
  %s1 = inlined_call_operand.hbm [shape: bf16[1024,512], index: 1, kind: input, shape index: {}]
  %s2 = inlined_call_operand.hbm [shape: f32[1,512], index: 2, kind: input, shape index: {}]
  %s3 = inlined_call_operand.hbm [shape: bf16[512,256], index: 3, kind: input, shape index: {}]
  %s4 = inlined_call_operand.vmem [shape: f32[1,256], index: 4, kind: input, shape index: {}]
  %s5 = inlined_call_operand.vmem [shape: bf16[1,256], index: 5, kind: input, shape index: {}]
  %s6 = inlined_call_operand.<no memory space> [shape: f32[1], index: 6, kind: input, shape index: {}]
  %s7 = inlined_call_operand.hbm [shape: f32[1,8], index: 7, kind: output, shape index: {}]
  %s8 = sld [smem:[#allocation0]]
  $region54: #{tpu_custom_call.1} parent=0
    _
  %s10 = ssub.s32 1, %s8
  %s11 = scalar_select 0, %s10, %s8
  %12 = sst [smem:[#allocation2]] %s6
  $region1: #{tpu_custom_call.1} parent=0
    #allocation3 [shape = 'u8[32768]{0}', space=vmem, size = 0x8000, scoped, tag = 'input window, operand 0, single buffered']
    #allocation4 [shape = 's32[1]{0}', space=sflag, size = 0x4, scoped, tag = 'scoped memory for tpu_custom_call.1']
    #allocation5 [shape = 's32[1]{0}', space=sflag, size = 0x4, scoped, tag = 'scoped memory for tpu_custom_call.1']
    #allocation6 [shape = 'u8[1048576]{0}', space=vmem, size = 0x100000, scoped, tag = 'input window, operand 1, single buffered']
    #allocation7 [shape = 's32[1]{0}', space=sflag, size = 0x4, scoped, tag = 'scoped memory for tpu_custom_call.1']
    #allocation8 [shape = 'u8[2048]{0}', space=vmem, size = 0x800, scoped, tag = 'input window, operand 2, single buffered']
    #allocation9 [shape = 'u8[262144]{0}', space=vmem, size = 0x40000, scoped, tag = 'input window, operand 3, single buffered']
    #allocation10 [shape = 's32[1]{0}', space=sflag, size = 0x4, scoped, tag = 'scoped memory for tpu_custom_call.1']
    #allocation11 [shape = 'u8[512]{0}', space=vmem, size = 0x400, scoped, tag = 'output window, operand 0, single buffered']
    %13 = vsyncpa [#allocation4], 0
    %14 = vsyncpa [#allocation7], 0
    %15 = vsyncpa [#allocation10], 0
    %16 = vsyncpa [#allocation5], 0
    // Predicated region
    $region2: #{tpu_custom_call.1} parent=1 // pred_check
      _
    $region3: #{tpu_custom_call.1} parent=1 // pred_check_branch
      %18 = sbr.rel (0) target = $region5
    $region4: #{tpu_custom_call.1} parent=1 // pred_region
      %20 = vsyncadd [#allocation4], 768
      %s21 = sshll.u32 %s0, 4
      %s22 = int_to_ptr.hbm [resolvable:$true] %s21
      %s23 = sshll.u32 [#allocation3], 4
      %s24 = int_to_ptr.vmem [resolvable:$true] %s23
      %29 = dma.hbm_to_vmem [thread:$0]  %s22, 256, %s24, [#allocation4], 256, 256, 16
    $region5: #{tpu_custom_call.1} parent=1 // pred_fallthru
      _
    // Predicated region
    $region6: #{tpu_custom_call.1} parent=1 // pred_check
      _
    $region7: #{tpu_custom_call.1} parent=1 // pred_check_branch
      %31 = sbr.rel (0) target = $region9
    $region8: #{tpu_custom_call.1} parent=1 // pred_region
      %33 = vsyncadd [#allocation7], 0
      %s34 = sshll.u32 %s1, 4
      %s35 = int_to_ptr.hbm [resolvable:$true] %s34
      %s36 = sshll.u32 [#allocation6], 4
      %s37 = int_to_ptr.vmem [resolvable:$true] %s36
      %42 = dma.hbm_to_vmem [thread:$0]  %s35, 32768, %s37, [#allocation7], 256, 256, 16
    $region9: #{tpu_custom_call.1} parent=1 // pred_fallthru
      _
    // Predicated region
    $region10: #{tpu_custom_call.1} parent=1 // pred_check
      _
    $region11: #{tpu_custom_call.1} parent=1 // pred_check_branch
      %44 = sbr.rel (0) target = $region13
    $region12: #{tpu_custom_call.1} parent=1 // pred_region
      %46 = vsyncadd [#allocation7], 0
      %s48 = sshll.u32 %s2, 4
      %s49 = int_to_ptr.hbm [resolvable:$true] %s48
      %s50 = sshll.u32 [#allocation8], 4
      %s51 = int_to_ptr.vmem [resolvable:$true] %s50
      %53 = dma.hbm_to_vmem [thread:$0]  %s49, 64, %s51, [#allocation7]
    $region13: #{tpu_custom_call.1} parent=1 // pred_fallthru
      _
    // Predicated region
    $region14: #{tpu_custom_call.1} parent=1 // pred_check
      _
    $region15: #{tpu_custom_call.1} parent=1 // pred_check_branch
      %55 = sbr.rel (0) target = $region17
    $region16: #{tpu_custom_call.1} parent=1 // pred_region
      %57 = vsyncadd [#allocation10], 0
      %s58 = sshll.u32 %s3, 4
      %s59 = int_to_ptr.hbm [resolvable:$true] %s58
      %s60 = sshll.u32 [#allocation9], 4
      %s61 = int_to_ptr.vmem [resolvable:$true] %s60
      %66 = dma.hbm_to_vmem [thread:$0]  %s59, 8192, %s61, [#allocation10], 128, 128, 8
    $region17: #{tpu_custom_call.1} parent=1 // pred_fallthru
      _
    // Predicated region
    $region18: #{tpu_custom_call.1} parent=1 // pred_check
      _
    $region19: #{tpu_custom_call.1} parent=1 // pred_check_branch
      %68 = sbr.rel (0) target = $region21
    $region20: #{tpu_custom_call.1} parent=1 // pred_region
      _
    $region21: #{tpu_custom_call.1} parent=1 // pred_fallthru
      _
    // Predicated region
    $region22: #{tpu_custom_call.1} parent=1 // pred_check
      _
    $region23: #{tpu_custom_call.1} parent=1 // pred_check_branch
      %70 = sbr.rel (0) target = $region25
    $region24: #{tpu_custom_call.1} parent=1 // pred_region
      _
    $region25: #{tpu_custom_call.1} parent=1 // pred_fallthru
      _
    // Predicated region
    $region26: #{tpu_custom_call.1} parent=1 // pred_check
      _
    $region27: #{tpu_custom_call.1} parent=1 // pred_check_branch
      %72 = sbr.rel (0) target = $region29
    $region28: #{tpu_custom_call.1} parent=1 // pred_region
      _
    $region29: #{tpu_custom_call.1} parent=1 // pred_fallthru
      _
    // Predicated region
    $region30: #{tpu_custom_call.1} parent=1 // pred_check
      _
    $region31: #{tpu_custom_call.1} parent=1 // pred_check_branch
      %74 = sbr.rel (0) target = $region33
    $region32: #{tpu_custom_call.1} parent=1 // pred_region
      %76 = dma.done [#allocation4], 1024
    $region33: #{tpu_custom_call.1} parent=1 // pred_fallthru
      _
    // Predicated region
    $region34: #{tpu_custom_call.1} parent=1 // pred_check
      _
    $region35: #{tpu_custom_call.1} parent=1 // pred_check_branch
      %78 = sbr.rel (0) target = $region37
    $region36: #{tpu_custom_call.1} parent=1 // pred_region
      %80 = dma.done [#allocation7], 32768
    $region37: #{tpu_custom_call.1} parent=1 // pred_fallthru
      _
    // Predicated region
    $region38: #{tpu_custom_call.1} parent=1 // pred_check
      _
    $region39: #{tpu_custom_call.1} parent=1 // pred_check_branch
      %82 = sbr.rel (0) target = $region41
    $region40: #{tpu_custom_call.1} parent=1 // pred_region
      %84 = dma.done [#allocation7], 64
    $region41: #{tpu_custom_call.1} parent=1 // pred_fallthru
      _
    // Predicated region
    $region42: #{tpu_custom_call.1} parent=1 // pred_check
      _
    $region43: #{tpu_custom_call.1} parent=1 // pred_check_branch
      %86 = sbr.rel (0) target = $region45
    $region44: #{tpu_custom_call.1} parent=1 // pred_region
      %88 = dma.done [#allocation10], 8192
    $region45: #{tpu_custom_call.1} parent=1 // pred_fallthru
      _
    %v89 = vld [vmem:[#allocation3] sm:$0xff]
    %v90 = vld [vmem:[#allocation3 + $0x8] sm:$0xff]
    %v91 = vld [vmem:[#allocation3 + $0x10] sm:$0xff]
    %v92 = vld [vmem:[#allocation3 + $0x18] sm:$0xff]
    %v93 = vld [vmem:[#allocation3 + $0x20] sm:$0xff]
    %v94 = vld [vmem:[#allocation3 + $0x28] sm:$0xff]
    %v95 = vld [vmem:[#allocation3 + $0x30] sm:$0xff]
    %v96 = vld [vmem:[#allocation3 + $0x38] sm:$0xff]
    %105 = vst [vmem:[#allocation1] ss:$4 sm:$0xff] %v89
    %s106 = scalar_lea.vmem [#allocation1], 1
    %107 = vst [vmem:[%s106] ss:$4 sm:$0xff] %v91
    %s108 = scalar_lea.vmem [#allocation1], 2
    %109 = vst [vmem:[%s108] ss:$4 sm:$0xff] %v93
    %s110 = scalar_lea.vmem [#allocation1], 3
    %111 = vst [vmem:[%s110] ss:$4 sm:$0xff] %v95
    %s112 = scalar_lea.vmem [#allocation1], 32
    %113 = vst [vmem:[%s112] ss:$4 sm:$0xff] %v90
    %s114 = scalar_lea.vmem [#allocation1], 33
    %115 = vst [vmem:[%s114] ss:$4 sm:$0xff] %v92
    %s116 = scalar_lea.vmem [#allocation1], 34
    %117 = vst [vmem:[%s116] ss:$4 sm:$0xff] %v94
    %s118 = scalar_lea.vmem [#allocation1], 35
    %119 = vst [vmem:[%s118] ss:$4 sm:$0xff] %v96
    %v120 = vld.sshfl [vmem:[#allocation1] sm:$0xff pattern:$0x73625140]
    %v121 = vld.sshfl [vmem:[#allocation1 + $0x8] sm:$0xff pattern:$0x73625140]
    %v122 = vld.sshfl [vmem:[#allocation1 + $0x10] sm:$0xff pattern:$0x73625140]
    %v123 = vld.sshfl [vmem:[#allocation1 + $0x18] sm:$0xff pattern:$0x73625140]
    %v124 = vld.sshfl [vmem:[#allocation1 + $0x20] sm:$0xff pattern:$0x73625140]
    %v125 = vld.sshfl [vmem:[#allocation1 + $0x28] sm:$0xff pattern:$0x73625140]
    %v126 = vld.sshfl [vmem:[#allocation1 + $0x30] sm:$0xff pattern:$0x73625140]
    %v127 = vld.sshfl [vmem:[#allocation1 + $0x38] sm:$0xff pattern:$0x73625140]
    %v136 = vpack.c.bf16 %v120, %v120
    %v137 = vpack.c.bf16 %v121, %v121
    %v138 = vpack.c.bf16 %v122, %v122
    %v139 = vpack.c.bf16 %v123, %v123
    %v140 = vpack.c.bf16 %v124, %v124
    %v141 = vpack.c.bf16 %v125, %v125
    %v142 = vpack.c.bf16 %v126, %v126
    %v143 = vpack.c.bf16 %v127, %v127
    %v144 = vld [vmem:[#allocation6] sm:$0xff]
    %v145 = vld [vmem:[#allocation6 + $0x8] sm:$0xff]
    %v146 = vld [vmem:[#allocation6 + $0x10] sm:$0xff]
    %v147 = vld [vmem:[#allocation6 + $0x18] sm:$0xff]
    %v148 = vld [vmem:[#allocation6 + $0x20] sm:$0xff]
    %v149 = vld [vmem:[#allocation6 + $0x28] sm:$0xff]
    %v150 = vld [vmem:[#allocation6 + $0x30] sm:$0xff]
    %v151 = vld [vmem:[#allocation6 + $0x38] sm:$0xff]
    %v152 = vld [vmem:[#allocation6 + $0x40] sm:$0xff]
    %v153 = vld [vmem:[#allocation6 + $0x48] sm:$0xff]
    %v154 = vld [vmem:[#allocation6 + $0x50] sm:$0xff]
    %v155 = vld [vmem:[#allocation6 + $0x58] sm:$0xff]
    %v156 = vld [vmem:[#allocation6 + $0x60] sm:$0xff]
    %v157 = vld [vmem:[#allocation6 + $0x68] sm:$0xff]
    %v158 = vld [vmem:[#allocation6 + $0x70] sm:$0xff]
    %v159 = vld [vmem:[#allocation6 + $0x78] sm:$0xff]
    %v160 = vld [vmem:[#allocation6 + $0x80] sm:$0xff]
    %v161 = vld [vmem:[#allocation6 + $0x88] sm:$0xff]
    %v162 = vld [vmem:[#allocation6 + $0x90] sm:$0xff]
    %v163 = vld [vmem:[#allocation6 + $0x98] sm:$0xff]
    %v164 = vld [vmem:[#allocation6 + $0xa0] sm:$0xff]
    %v165 = vld [vmem:[#allocation6 + $0xa8] sm:$0xff]
    %v166 = vld [vmem:[#allocation6 + $0xb0] sm:$0xff]
    %v167 = vld [vmem:[#allocation6 + $0xb8] sm:$0xff]
    %v168 = vld [vmem:[#allocation6 + $0xc0] sm:$0xff]
    %v169 = vld [vmem:[#allocation6 + $0xc8] sm:$0xff]
    %v170 = vld [vmem:[#allocation6 + $0xd0] sm:$0xff]
    %v171 = vld [vmem:[#allocation6 + $0xd8] sm:$0xff]
    %v172 = vld [vmem:[#allocation6 + $0xe0] sm:$0xff]
    %v173 = vld [vmem:[#allocation6 + $0xe8] sm:$0xff]
    %v174 = vld [vmem:[#allocation6 + $0xf0] sm:$0xff]
    %v175 = vld [vmem:[#allocation6 + $0xf8] sm:$0xff]
    %v176 = vld [vmem:[#allocation6 + $0x100] sm:$0xff]
    %v177 = vld [vmem:[#allocation6 + $0x108] sm:$0xff]
    %v178 = vld [vmem:[#allocation6 + $0x110] sm:$0xff]
    %v179 = vld [vmem:[#allocation6 + $0x118] sm:$0xff]
    %v180 = vld [vmem:[#allocation6 + $0x120] sm:$0xff]
    %v181 = vld [vmem:[#allocation6 + $0x128] sm:$0xff]
    %v182 = vld [vmem:[#allocation6 + $0x130] sm:$0xff]
    %v183 = vld [vmem:[#allocation6 + $0x138] sm:$0xff]
    %v184 = vld [vmem:[#allocation6 + $0x140] sm:$0xff]
    %v185 = vld [vmem:[#allocation6 + $0x148] sm:$0xff]
    %v186 = vld [vmem:[#allocation6 + $0x150] sm:$0xff]
    %v187 = vld [vmem:[#allocation6 + $0x158] sm:$0xff]
    %v188 = vld [vmem:[#allocation6 + $0x160] sm:$0xff]
    %v189 = vld [vmem:[#allocation6 + $0x168] sm:$0xff]
    %v190 = vld [vmem:[#allocation6 + $0x170] sm:$0xff]
    %v191 = vld [vmem:[#allocation6 + $0x178] sm:$0xff]
    %v192 = vld [vmem:[#allocation6 + $0x180] sm:$0xff]
    %v193 = vld [vmem:[#allocation6 + $0x188] sm:$0xff]
    %v194 = vld [vmem:[#allocation6 + $0x190] sm:$0xff]
    %v195 = vld [vmem:[#allocation6 + $0x198] sm:$0xff]
    %v196 = vld [vmem:[#allocation6 + $0x1a0] sm:$0xff]
    %v197 = vld [vmem:[#allocation6 + $0x1a8] sm:$0xff]
    %v198 = vld [vmem:[#allocation6 + $0x1b0] sm:$0xff]
    %v199 = vld [vmem:[#allocation6 + $0x1b8] sm:$0xff]
    %v200 = vld [vmem:[#allocation6 + $0x1c0] sm:$0xff]
    %v201 = vld [vmem:[#allocation6 + $0x1c8] sm:$0xff]
    %v202 = vld [vmem:[#allocation6 + $0x1d0] sm:$0xff]
    %v203 = vld [vmem:[#allocation6 + $0x1d8] sm:$0xff]
    %v204 = vld [vmem:[#allocation6 + $0x1e0] sm:$0xff]
    %v205 = vld [vmem:[#allocation6 + $0x1e8] sm:$0xff]
    %v206 = vld [vmem:[#allocation6 + $0x1f0] sm:$0xff]
    %v207 = vld [vmem:[#allocation6 + $0x1f8] sm:$0xff]
    %v208 = vld [vmem:[#allocation6 + $0x200] sm:$0xff]
    %v209 = vld [vmem:[#allocation6 + $0x208] sm:$0xff]
    %v210 = vld [vmem:[#allocation6 + $0x210] sm:$0xff]
    %v211 = vld [vmem:[#allocation6 + $0x218] sm:$0xff]
    %v212 = vld [vmem:[#allocation6 + $0x220] sm:$0xff]
    %v213 = vld [vmem:[#allocation6 + $0x228] sm:$0xff]
    %v214 = vld [vmem:[#allocation6 + $0x230] sm:$0xff]
    %v215 = vld [vmem:[#allocation6 + $0x238] sm:$0xff]
    %v216 = vld [vmem:[#allocation6 + $0x240] sm:$0xff]
    %v217 = vld [vmem:[#allocation6 + $0x248] sm:$0xff]
    %v218 = vld [vmem:[#allocation6 + $0x250] sm:$0xff]
    %v219 = vld [vmem:[#allocation6 + $0x258] sm:$0xff]
    %v220 = vld [vmem:[#allocation6 + $0x260] sm:$0xff]
    %v221 = vld [vmem:[#allocation6 + $0x268] sm:$0xff]
    %v222 = vld [vmem:[#allocation6 + $0x270] sm:$0xff]
    %v223 = vld [vmem:[#allocation6 + $0x278] sm:$0xff]
    %v224 = vld [vmem:[#allocation6 + $0x280] sm:$0xff]
    %v225 = vld [vmem:[#allocation6 + $0x288] sm:$0xff]
    %v226 = vld [vmem:[#allocation6 + $0x290] sm:$0xff]
    %v227 = vld [vmem:[#allocation6 + $0x298] sm:$0xff]
    %v228 = vld [vmem:[#allocation6 + $0x2a0] sm:$0xff]
    %v229 = vld [vmem:[#allocation6 + $0x2a8] sm:$0xff]
    %v230 = vld [vmem:[#allocation6 + $0x2b0] sm:$0xff]
    %v231 = vld [vmem:[#allocation6 + $0x2b8] sm:$0xff]
    %v232 = vld [vmem:[#allocation6 + $0x2c0] sm:$0xff]
    %v233 = vld [vmem:[#allocation6 + $0x2c8] sm:$0xff]
    %v234 = vld [vmem:[#allocation6 + $0x2d0] sm:$0xff]
    %v235 = vld [vmem:[#allocation6 + $0x2d8] sm:$0xff]
    %v236 = vld [vmem:[#allocation6 + $0x2e0] sm:$0xff]
    %v237 = vld [vmem:[#allocation6 + $0x2e8] sm:$0xff]
    %v238 = vld [vmem:[#allocation6 + $0x2f0] sm:$0xff]
    %v239 = vld [vmem:[#allocation6 + $0x2f8] sm:$0xff]
    %v240 = vld [vmem:[#allocation6 + $0x300] sm:$0xff]
    %v241 = vld [vmem:[#allocation6 + $0x308] sm:$0xff]
    %v242 = vld [vmem:[#allocation6 + $0x310] sm:$0xff]
    %v243 = vld [vmem:[#allocation6 + $0x318] sm:$0xff]
    %v244 = vld [vmem:[#allocation6 + $0x320] sm:$0xff]
    %v245 = vld [vmem:[#allocation6 + $0x328] sm:$0xff]
    %v246 = vld [vmem:[#allocation6 + $0x330] sm:$0xff]
    %v247 = vld [vmem:[#allocation6 + $0x338] sm:$0xff]
    %v248 = vld [vmem:[#allocation6 + $0x340] sm:$0xff]
    %v249 = vld [vmem:[#allocation6 + $0x348] sm:$0xff]
    %v250 = vld [vmem:[#allocation6 + $0x350] sm:$0xff]
    %v251 = vld [vmem:[#allocation6 + $0x358] sm:$0xff]
    %v252 = vld [vmem:[#allocation6 + $0x360] sm:$0xff]
    %v253 = vld [vmem:[#allocation6 + $0x368] sm:$0xff]
    %v254 = vld [vmem:[#allocation6 + $0x370] sm:$0xff]
    %v255 = vld [vmem:[#allocation6 + $0x378] sm:$0xff]
    %v256 = vld [vmem:[#allocation6 + $0x380] sm:$0xff]
    %v257 = vld [vmem:[#allocation6 + $0x388] sm:$0xff]
    %v258 = vld [vmem:[#allocation6 + $0x390] sm:$0xff]
    %v259 = vld [vmem:[#allocation6 + $0x398] sm:$0xff]
    %v260 = vld [vmem:[#allocation6 + $0x3a0] sm:$0xff]
    %v261 = vld [vmem:[#allocation6 + $0x3a8] sm:$0xff]
    %v262 = vld [vmem:[#allocation6 + $0x3b0] sm:$0xff]
    %v263 = vld [vmem:[#allocation6 + $0x3b8] sm:$0xff]
    %v264 = vld [vmem:[#allocation6 + $0x3c0] sm:$0xff]
    %v265 = vld [vmem:[#allocation6 + $0x3c8] sm:$0xff]
    %v266 = vld [vmem:[#allocation6 + $0x3d0] sm:$0xff]
    %v267 = vld [vmem:[#allocation6 + $0x3d8] sm:$0xff]
    %v268 = vld [vmem:[#allocation6 + $0x3e0] sm:$0xff]
    %v269 = vld [vmem:[#allocation6 + $0x3e8] sm:$0xff]
    %v270 = vld [vmem:[#allocation6 + $0x3f0] sm:$0xff]
    %v271 = vld [vmem:[#allocation6 + $0x3f8] sm:$0xff]
    %v272 = vld [vmem:[#allocation6 + $0x400] sm:$0xff]
    %v273 = vld [vmem:[#allocation6 + $0x408] sm:$0xff]
    %v274 = vld [vmem:[#allocation6 + $0x410] sm:$0xff]
    %v275 = vld [vmem:[#allocation6 + $0x418] sm:$0xff]
    %v276 = vld [vmem:[#allocation6 + $0x420] sm:$0xff]
    %v277 = vld [vmem:[#allocation6 + $0x428] sm:$0xff]
    %v278 = vld [vmem:[#allocation6 + $0x430] sm:$0xff]
    %v279 = vld [vmem:[#allocation6 + $0x438] sm:$0xff]
    %v280 = vld [vmem:[#allocation6 + $0x440] sm:$0xff]
    %v281 = vld [vmem:[#allocation6 + $0x448] sm:$0xff]
    %v282 = vld [vmem:[#allocation6 + $0x450] sm:$0xff]
    %v283 = vld [vmem:[#allocation6 + $0x458] sm:$0xff]
    %v284 = vld [vmem:[#allocation6 + $0x460] sm:$0xff]
    %v285 = vld [vmem:[#allocation6 + $0x468] sm:$0xff]
    %v286 = vld [vmem:[#allocation6 + $0x470] sm:$0xff]
    %v287 = vld [vmem:[#allocation6 + $0x478] sm:$0xff]
    %v288 = vld [vmem:[#allocation6 + $0x480] sm:$0xff]
    %v289 = vld [vmem:[#allocation6 + $0x488] sm:$0xff]
    %v290 = vld [vmem:[#allocation6 + $0x490] sm:$0xff]
    %v291 = vld [vmem:[#allocation6 + $0x498] sm:$0xff]
    %v292 = vld [vmem:[#allocation6 + $0x4a0] sm:$0xff]
    %v293 = vld [vmem:[#allocation6 + $0x4a8] sm:$0xff]
    %v294 = vld [vmem:[#allocation6 + $0x4b0] sm:$0xff]
    %v295 = vld [vmem:[#allocation6 + $0x4b8] sm:$0xff]
    %v296 = vld [vmem:[#allocation6 + $0x4c0] sm:$0xff]
    %v297 = vld [vmem:[#allocation6 + $0x4c8] sm:$0xff]
    %v298 = vld [vmem:[#allocation6 + $0x4d0] sm:$0xff]
    %v299 = vld [vmem:[#allocation6 + $0x4d8] sm:$0xff]
    %v300 = vld [vmem:[#allocation6 + $0x4e0] sm:$0xff]
    %v301 = vld [vmem:[#allocation6 + $0x4e8] sm:$0xff]
    %v302 = vld [vmem:[#allocation6 + $0x4f0] sm:$0xff]
    %v303 = vld [vmem:[#allocation6 + $0x4f8] sm:$0xff]
    %v304 = vld [vmem:[#allocation6 + $0x500] sm:$0xff]
    %v305 = vld [vmem:[#allocation6 + $0x508] sm:$0xff]
    %v306 = vld [vmem:[#allocation6 + $0x510] sm:$0xff]
    %v307 = vld [vmem:[#allocation6 + $0x518] sm:$0xff]
    %v308 = vld [vmem:[#allocation6 + $0x520] sm:$0xff]
    %v309 = vld [vmem:[#allocation6 + $0x528] sm:$0xff]
    %v310 = vld [vmem:[#allocation6 + $0x530] sm:$0xff]
    %v311 = vld [vmem:[#allocation6 + $0x538] sm:$0xff]
    %v312 = vld [vmem:[#allocation6 + $0x540] sm:$0xff]
    %v313 = vld [vmem:[#allocation6 + $0x548] sm:$0xff]
    %v314 = vld [vmem:[#allocation6 + $0x550] sm:$0xff]
    %v315 = vld [vmem:[#allocation6 + $0x558] sm:$0xff]
    %v316 = vld [vmem:[#allocation6 + $0x560] sm:$0xff]
    %v317 = vld [vmem:[#allocation6 + $0x568] sm:$0xff]
    %v318 = vld [vmem:[#allocation6 + $0x570] sm:$0xff]
    %v319 = vld [vmem:[#allocation6 + $0x578] sm:$0xff]
    %v320 = vld [vmem:[#allocation6 + $0x580] sm:$0xff]
    %v321 = vld [vmem:[#allocation6 + $0x588] sm:$0xff]
    %v322 = vld [vmem:[#allocation6 + $0x590] sm:$0xff]
    %v323 = vld [vmem:[#allocation6 + $0x598] sm:$0xff]
    %v324 = vld [vmem:[#allocation6 + $0x5a0] sm:$0xff]
    %v325 = vld [vmem:[#allocation6 + $0x5a8] sm:$0xff]
    %v326 = vld [vmem:[#allocation6 + $0x5b0] sm:$0xff]
    %v327 = vld [vmem:[#allocation6 + $0x5b8] sm:$0xff]
    %v328 = vld [vmem:[#allocation6 + $0x5c0] sm:$0xff]
    %v329 = vld [vmem:[#allocation6 + $0x5c8] sm:$0xff]
    %v330 = vld [vmem:[#allocation6 + $0x5d0] sm:$0xff]
    %v331 = vld [vmem:[#allocation6 + $0x5d8] sm:$0xff]
    %v332 = vld [vmem:[#allocation6 + $0x5e0] sm:$0xff]
    %v333 = vld [vmem:[#allocation6 + $0x5e8] sm:$0xff]
    %v334 = vld [vmem:[#allocation6 + $0x5f0] sm:$0xff]
    %v335 = vld [vmem:[#allocation6 + $0x5f8] sm:$0xff]
    %v336 = vld [vmem:[#allocation6 + $0x600] sm:$0xff]
    %v337 = vld [vmem:[#allocation6 + $0x608] sm:$0xff]
    %v338 = vld [vmem:[#allocation6 + $0x610] sm:$0xff]
    %v339 = vld [vmem:[#allocation6 + $0x618] sm:$0xff]
    %v340 = vld [vmem:[#allocation6 + $0x620] sm:$0xff]
    %v341 = vld [vmem:[#allocation6 + $0x628] sm:$0xff]
    %v342 = vld [vmem:[#allocation6 + $0x630] sm:$0xff]
    %v343 = vld [vmem:[#allocation6 + $0x638] sm:$0xff]
    %v344 = vld [vmem:[#allocation6 + $0x640] sm:$0xff]
    %v345 = vld [vmem:[#allocation6 + $0x648] sm:$0xff]
    %v346 = vld [vmem:[#allocation6 + $0x650] sm:$0xff]
    %v347 = vld [vmem:[#allocation6 + $0x658] sm:$0xff]
    %v348 = vld [vmem:[#allocation6 + $0x660] sm:$0xff]
    %v349 = vld [vmem:[#allocation6 + $0x668] sm:$0xff]
    %v350 = vld [vmem:[#allocation6 + $0x670] sm:$0xff]
    %v351 = vld [vmem:[#allocation6 + $0x678] sm:$0xff]
    %v352 = vld [vmem:[#allocation6 + $0x680] sm:$0xff]
    %v353 = vld [vmem:[#allocation6 + $0x688] sm:$0xff]
    %v354 = vld [vmem:[#allocation6 + $0x690] sm:$0xff]
    %v355 = vld [vmem:[#allocation6 + $0x698] sm:$0xff]
    %v356 = vld [vmem:[#allocation6 + $0x6a0] sm:$0xff]
    %v357 = vld [vmem:[#allocation6 + $0x6a8] sm:$0xff]
    %v358 = vld [vmem:[#allocation6 + $0x6b0] sm:$0xff]
    %v359 = vld [vmem:[#allocation6 + $0x6b8] sm:$0xff]
    %v360 = vld [vmem:[#allocation6 + $0x6c0] sm:$0xff]
    %v361 = vld [vmem:[#allocation6 + $0x6c8] sm:$0xff]
    %v362 = vld [vmem:[#allocation6 + $0x6d0] sm:$0xff]
    %v363 = vld [vmem:[#allocation6 + $0x6d8] sm:$0xff]
    %v364 = vld [vmem:[#allocation6 + $0x6e0] sm:$0xff]
    %v365 = vld [vmem:[#allocation6 + $0x6e8] sm:$0xff]
    %v366 = vld [vmem:[#allocation6 + $0x6f0] sm:$0xff]
    %v367 = vld [vmem:[#allocation6 + $0x6f8] sm:$0xff]
    %v368 = vld [vmem:[#allocation6 + $0x700] sm:$0xff]
    %v369 = vld [vmem:[#allocation6 + $0x708] sm:$0xff]
    %v370 = vld [vmem:[#allocation6 + $0x710] sm:$0xff]
    %v371 = vld [vmem:[#allocation6 + $0x718] sm:$0xff]
    %v372 = vld [vmem:[#allocation6 + $0x720] sm:$0xff]
    %v373 = vld [vmem:[#allocation6 + $0x728] sm:$0xff]
    %v374 = vld [vmem:[#allocation6 + $0x730] sm:$0xff]
    %v375 = vld [vmem:[#allocation6 + $0x738] sm:$0xff]
    %v376 = vld [vmem:[#allocation6 + $0x740] sm:$0xff]
    %v377 = vld [vmem:[#allocation6 + $0x748] sm:$0xff]
    %v378 = vld [vmem:[#allocation6 + $0x750] sm:$0xff]
    %v379 = vld [vmem:[#allocation6 + $0x758] sm:$0xff]
    %v380 = vld [vmem:[#allocation6 + $0x760] sm:$0xff]
    %v381 = vld [vmem:[#allocation6 + $0x768] sm:$0xff]
    %v382 = vld [vmem:[#allocation6 + $0x770] sm:$0xff]
    %v383 = vld [vmem:[#allocation6 + $0x778] sm:$0xff]
    %v384 = vld [vmem:[#allocation6 + $0x780] sm:$0xff]
    %v385 = vld [vmem:[#allocation6 + $0x788] sm:$0xff]
    %v386 = vld [vmem:[#allocation6 + $0x790] sm:$0xff]
    %v387 = vld [vmem:[#allocation6 + $0x798] sm:$0xff]
    %v388 = vld [vmem:[#allocation6 + $0x7a0] sm:$0xff]
    %v389 = vld [vmem:[#allocation6 + $0x7a8] sm:$0xff]
    %v390 = vld [vmem:[#allocation6 + $0x7b0] sm:$0xff]
    %v391 = vld [vmem:[#allocation6 + $0x7b8] sm:$0xff]
    %v392 = vld [vmem:[#allocation6 + $0x7c0] sm:$0xff]
    %v393 = vld [vmem:[#allocation6 + $0x7c8] sm:$0xff]
    %v394 = vld [vmem:[#allocation6 + $0x7d0] sm:$0xff]
    %v395 = vld [vmem:[#allocation6 + $0x7d8] sm:$0xff]
    %v396 = vld [vmem:[#allocation6 + $0x7e0] sm:$0xff]
    %v397 = vld [vmem:[#allocation6 + $0x7e8] sm:$0xff]
    %v398 = vld [vmem:[#allocation6 + $0x7f0] sm:$0xff]
    %v399 = vld [vmem:[#allocation6 + $0x7f8] sm:$0xff]
    %v400 = vld [vmem:[#allocation8] sm:$0xf]
    %v402 = vperm.slane %v400, 0
    %v403 = vperm.slane %v400, 1
    %v404 = vperm.slane %v400, 2
    %v405 = vperm.slane %v400, 3
    %v666 = vunpack.c.l.b16 %v144
    %v667 = vunpack.c.h.b16 %v144
    %v668 = vunpack.c.l.b16 %v145
    %v669 = vunpack.c.h.b16 %v145
    %v670 = vunpack.c.l.b16 %v146
    %v671 = vunpack.c.h.b16 %v146
    %v672 = vunpack.c.l.b16 %v147
    %v673 = vunpack.c.h.b16 %v147
    %v674 = vunpack.c.l.b16 %v148
    %v675 = vunpack.c.h.b16 %v148
    %v676 = vunpack.c.l.b16 %v149
    %v677 = vunpack.c.h.b16 %v149
    %v678 = vunpack.c.l.b16 %v150
    %v679 = vunpack.c.h.b16 %v150
    %v680 = vunpack.c.l.b16 %v151
    %v681 = vunpack.c.h.b16 %v151
    %v682 = vunpack.c.l.b16 %v152
    %v683 = vunpack.c.h.b16 %v152
    %v684 = vunpack.c.l.b16 %v153
    %v685 = vunpack.c.h.b16 %v153
    %v686 = vunpack.c.l.b16 %v154
    %v687 = vunpack.c.h.b16 %v154
    %v688 = vunpack.c.l.b16 %v155
    %v689 = vunpack.c.h.b16 %v155
    %v690 = vunpack.c.l.b16 %v156
    %v691 = vunpack.c.h.b16 %v156
    %v692 = vunpack.c.l.b16 %v157
    %v693 = vunpack.c.h.b16 %v157
    %v694 = vunpack.c.l.b16 %v158
    %v695 = vunpack.c.h.b16 %v158
    %v696 = vunpack.c.l.b16 %v159
    %v697 = vunpack.c.h.b16 %v159
    %v698 = vunpack.c.l.b16 %v160
    %v699 = vunpack.c.h.b16 %v160
    %v700 = vunpack.c.l.b16 %v161
    %v701 = vunpack.c.h.b16 %v161
    %v702 = vunpack.c.l.b16 %v162
    %v703 = vunpack.c.h.b16 %v162
    %v704 = vunpack.c.l.b16 %v163
    %v705 = vunpack.c.h.b16 %v163
    %v706 = vunpack.c.l.b16 %v164
    %v707 = vunpack.c.h.b16 %v164
    %v708 = vunpack.c.l.b16 %v165
    %v709 = vunpack.c.h.b16 %v165
    %v710 = vunpack.c.l.b16 %v166
    %v711 = vunpack.c.h.b16 %v166
    %v712 = vunpack.c.l.b16 %v167
    %v713 = vunpack.c.h.b16 %v167
    %v714 = vunpack.c.l.b16 %v168
    %v715 = vunpack.c.h.b16 %v168
    %v716 = vunpack.c.l.b16 %v169
    %v717 = vunpack.c.h.b16 %v169
    %v718 = vunpack.c.l.b16 %v170
    %v719 = vunpack.c.h.b16 %v170
    %v720 = vunpack.c.l.b16 %v171
    %v721 = vunpack.c.h.b16 %v171
    %v722 = vunpack.c.l.b16 %v172
    %v723 = vunpack.c.h.b16 %v172
    %v724 = vunpack.c.l.b16 %v173
    %v725 = vunpack.c.h.b16 %v173
    %v726 = vunpack.c.l.b16 %v174
    %v727 = vunpack.c.h.b16 %v174
    %v728 = vunpack.c.l.b16 %v175
    %v729 = vunpack.c.h.b16 %v175
    %v730 = vunpack.c.l.b16 %v176
    %v731 = vunpack.c.h.b16 %v176
    %v732 = vunpack.c.l.b16 %v177
    %v733 = vunpack.c.h.b16 %v177
    %v734 = vunpack.c.l.b16 %v178
    %v735 = vunpack.c.h.b16 %v178
    %v736 = vunpack.c.l.b16 %v179
    %v737 = vunpack.c.h.b16 %v179
    %v738 = vunpack.c.l.b16 %v180
    %v739 = vunpack.c.h.b16 %v180
    %v740 = vunpack.c.l.b16 %v181
    %v741 = vunpack.c.h.b16 %v181
    %v742 = vunpack.c.l.b16 %v182
    %v743 = vunpack.c.h.b16 %v182
    %v744 = vunpack.c.l.b16 %v183
    %v745 = vunpack.c.h.b16 %v183
    %v746 = vunpack.c.l.b16 %v184
    %v747 = vunpack.c.h.b16 %v184
    %v748 = vunpack.c.l.b16 %v185
    %v749 = vunpack.c.h.b16 %v185
    %v750 = vunpack.c.l.b16 %v186
    %v751 = vunpack.c.h.b16 %v186
    %v752 = vunpack.c.l.b16 %v187
    %v753 = vunpack.c.h.b16 %v187
    %v754 = vunpack.c.l.b16 %v188
    %v755 = vunpack.c.h.b16 %v188
    %v756 = vunpack.c.l.b16 %v189
    %v757 = vunpack.c.h.b16 %v189
    %v758 = vunpack.c.l.b16 %v190
    %v759 = vunpack.c.h.b16 %v190
    %v760 = vunpack.c.l.b16 %v191
    %v761 = vunpack.c.h.b16 %v191
    %v762 = vunpack.c.l.b16 %v192
    %v763 = vunpack.c.h.b16 %v192
    %v764 = vunpack.c.l.b16 %v193
    %v765 = vunpack.c.h.b16 %v193
    %v766 = vunpack.c.l.b16 %v194
    %v767 = vunpack.c.h.b16 %v194
    %v768 = vunpack.c.l.b16 %v195
    %v769 = vunpack.c.h.b16 %v195
    %v770 = vunpack.c.l.b16 %v196
    %v771 = vunpack.c.h.b16 %v196
    %v772 = vunpack.c.l.b16 %v197
    %v773 = vunpack.c.h.b16 %v197
    %v774 = vunpack.c.l.b16 %v198
    %v775 = vunpack.c.h.b16 %v198
    %v776 = vunpack.c.l.b16 %v199
    %v777 = vunpack.c.h.b16 %v199
    %v778 = vunpack.c.l.b16 %v200
    %v779 = vunpack.c.h.b16 %v200
    %v780 = vunpack.c.l.b16 %v201
    %v781 = vunpack.c.h.b16 %v201
    %v782 = vunpack.c.l.b16 %v202
    %v783 = vunpack.c.h.b16 %v202
    %v784 = vunpack.c.l.b16 %v203
    %v785 = vunpack.c.h.b16 %v203
    %v786 = vunpack.c.l.b16 %v204
    %v787 = vunpack.c.h.b16 %v204
    %v788 = vunpack.c.l.b16 %v205
    %v789 = vunpack.c.h.b16 %v205
    %v790 = vunpack.c.l.b16 %v206
    %v791 = vunpack.c.h.b16 %v206
    %v792 = vunpack.c.l.b16 %v207
    %v793 = vunpack.c.h.b16 %v207
    %v794 = vunpack.c.l.b16 %v208
    %v795 = vunpack.c.h.b16 %v208
    %v796 = vunpack.c.l.b16 %v209
    %v797 = vunpack.c.h.b16 %v209
    %v798 = vunpack.c.l.b16 %v210
    %v799 = vunpack.c.h.b16 %v210
    %v800 = vunpack.c.l.b16 %v211
    %v801 = vunpack.c.h.b16 %v211
    %v802 = vunpack.c.l.b16 %v212
    %v803 = vunpack.c.h.b16 %v212
    %v804 = vunpack.c.l.b16 %v213
    %v805 = vunpack.c.h.b16 %v213
    %v806 = vunpack.c.l.b16 %v214
    %v807 = vunpack.c.h.b16 %v214
    %v808 = vunpack.c.l.b16 %v215
    %v809 = vunpack.c.h.b16 %v215
    %v810 = vunpack.c.l.b16 %v216
    %v811 = vunpack.c.h.b16 %v216
    %v812 = vunpack.c.l.b16 %v217
    %v813 = vunpack.c.h.b16 %v217
    %v814 = vunpack.c.l.b16 %v218
    %v815 = vunpack.c.h.b16 %v218
    %v816 = vunpack.c.l.b16 %v219
    %v817 = vunpack.c.h.b16 %v219
    %v818 = vunpack.c.l.b16 %v220
    %v819 = vunpack.c.h.b16 %v220
    %v820 = vunpack.c.l.b16 %v221
    %v821 = vunpack.c.h.b16 %v221
    %v822 = vunpack.c.l.b16 %v222
    %v823 = vunpack.c.h.b16 %v222
    %v824 = vunpack.c.l.b16 %v223
    %v825 = vunpack.c.h.b16 %v223
    %v826 = vunpack.c.l.b16 %v224
    %v827 = vunpack.c.h.b16 %v224
    %v828 = vunpack.c.l.b16 %v225
    %v829 = vunpack.c.h.b16 %v225
    %v830 = vunpack.c.l.b16 %v226
    %v831 = vunpack.c.h.b16 %v226
    %v832 = vunpack.c.l.b16 %v227
    %v833 = vunpack.c.h.b16 %v227
    %v834 = vunpack.c.l.b16 %v228
    %v835 = vunpack.c.h.b16 %v228
    %v836 = vunpack.c.l.b16 %v229
    %v837 = vunpack.c.h.b16 %v229
    %v838 = vunpack.c.l.b16 %v230
    %v839 = vunpack.c.h.b16 %v230
    %v840 = vunpack.c.l.b16 %v231
    %v841 = vunpack.c.h.b16 %v231
    %v842 = vunpack.c.l.b16 %v232
    %v843 = vunpack.c.h.b16 %v232
    %v844 = vunpack.c.l.b16 %v233
    %v845 = vunpack.c.h.b16 %v233
    %v846 = vunpack.c.l.b16 %v234
    %v847 = vunpack.c.h.b16 %v234
    %v848 = vunpack.c.l.b16 %v235
    %v849 = vunpack.c.h.b16 %v235
    %v850 = vunpack.c.l.b16 %v236
    %v851 = vunpack.c.h.b16 %v236
    %v852 = vunpack.c.l.b16 %v237
    %v853 = vunpack.c.h.b16 %v237
    %v854 = vunpack.c.l.b16 %v238
    %v855 = vunpack.c.h.b16 %v238
    %v856 = vunpack.c.l.b16 %v239
    %v857 = vunpack.c.h.b16 %v239
    %v858 = vunpack.c.l.b16 %v240
    %v859 = vunpack.c.h.b16 %v240
    %v860 = vunpack.c.l.b16 %v241
    %v861 = vunpack.c.h.b16 %v241
    %v862 = vunpack.c.l.b16 %v242
    %v863 = vunpack.c.h.b16 %v242
    %v864 = vunpack.c.l.b16 %v243
    %v865 = vunpack.c.h.b16 %v243
    %v866 = vunpack.c.l.b16 %v244
    %v867 = vunpack.c.h.b16 %v244
    %v868 = vunpack.c.l.b16 %v245
    %v869 = vunpack.c.h.b16 %v245
    %v870 = vunpack.c.l.b16 %v246
    %v871 = vunpack.c.h.b16 %v246
    %v872 = vunpack.c.l.b16 %v247
    %v873 = vunpack.c.h.b16 %v247
    %v874 = vunpack.c.l.b16 %v248
    %v875 = vunpack.c.h.b16 %v248
    %v876 = vunpack.c.l.b16 %v249
    %v877 = vunpack.c.h.b16 %v249
    %v878 = vunpack.c.l.b16 %v250
    %v879 = vunpack.c.h.b16 %v250
    %v880 = vunpack.c.l.b16 %v251
    %v881 = vunpack.c.h.b16 %v251
    %v882 = vunpack.c.l.b16 %v252
    %v883 = vunpack.c.h.b16 %v252
    %v884 = vunpack.c.l.b16 %v253
    %v885 = vunpack.c.h.b16 %v253
    %v886 = vunpack.c.l.b16 %v254
    %v887 = vunpack.c.h.b16 %v254
    %v888 = vunpack.c.l.b16 %v255
    %v889 = vunpack.c.h.b16 %v255
    %v890 = vunpack.c.l.b16 %v256
    %v891 = vunpack.c.h.b16 %v256
    %v892 = vunpack.c.l.b16 %v257
    %v893 = vunpack.c.h.b16 %v257
    %v894 = vunpack.c.l.b16 %v258
    %v895 = vunpack.c.h.b16 %v258
    %v896 = vunpack.c.l.b16 %v259
    %v897 = vunpack.c.h.b16 %v259
    %v898 = vunpack.c.l.b16 %v260
    %v899 = vunpack.c.h.b16 %v260
    %v900 = vunpack.c.l.b16 %v261
    %v901 = vunpack.c.h.b16 %v261
    %v902 = vunpack.c.l.b16 %v262
    %v903 = vunpack.c.h.b16 %v262
    %v904 = vunpack.c.l.b16 %v263
    %v905 = vunpack.c.h.b16 %v263
    %v906 = vunpack.c.l.b16 %v264
    %v907 = vunpack.c.h.b16 %v264
    %v908 = vunpack.c.l.b16 %v265
    %v909 = vunpack.c.h.b16 %v265
    %v910 = vunpack.c.l.b16 %v266
    %v911 = vunpack.c.h.b16 %v266
    %v912 = vunpack.c.l.b16 %v267
    %v913 = vunpack.c.h.b16 %v267
    %v914 = vunpack.c.l.b16 %v268
    %v915 = vunpack.c.h.b16 %v268
    %v916 = vunpack.c.l.b16 %v269
    %v917 = vunpack.c.h.b16 %v269
    %v918 = vunpack.c.l.b16 %v270
    %v919 = vunpack.c.h.b16 %v270
    %v920 = vunpack.c.l.b16 %v271
    %v921 = vunpack.c.h.b16 %v271
    %v922 = vunpack.c.l.b16 %v272
    %v923 = vunpack.c.h.b16 %v272
    %v924 = vunpack.c.l.b16 %v273
    %v925 = vunpack.c.h.b16 %v273
    %v926 = vunpack.c.l.b16 %v274
    %v927 = vunpack.c.h.b16 %v274
    %v928 = vunpack.c.l.b16 %v275
    %v929 = vunpack.c.h.b16 %v275
    %v930 = vunpack.c.l.b16 %v276
    %v931 = vunpack.c.h.b16 %v276
    %v932 = vunpack.c.l.b16 %v277
    %v933 = vunpack.c.h.b16 %v277
    %v934 = vunpack.c.l.b16 %v278
    %v935 = vunpack.c.h.b16 %v278
    %v936 = vunpack.c.l.b16 %v279
    %v937 = vunpack.c.h.b16 %v279
    %v938 = vunpack.c.l.b16 %v280
    %v939 = vunpack.c.h.b16 %v280
    %v940 = vunpack.c.l.b16 %v281
    %v941 = vunpack.c.h.b16 %v281
    %v942 = vunpack.c.l.b16 %v282
    %v943 = vunpack.c.h.b16 %v282
    %v944 = vunpack.c.l.b16 %v283
    %v945 = vunpack.c.h.b16 %v283
    %v946 = vunpack.c.l.b16 %v284
    %v947 = vunpack.c.h.b16 %v284
    %v948 = vunpack.c.l.b16 %v285
    %v949 = vunpack.c.h.b16 %v285
    %v950 = vunpack.c.l.b16 %v286
    %v951 = vunpack.c.h.b16 %v286
    %v952 = vunpack.c.l.b16 %v287
    %v953 = vunpack.c.h.b16 %v287
    %v954 = vunpack.c.l.b16 %v288
    %v955 = vunpack.c.h.b16 %v288
    %v956 = vunpack.c.l.b16 %v289
    %v957 = vunpack.c.h.b16 %v289
    %v958 = vunpack.c.l.b16 %v290
    %v959 = vunpack.c.h.b16 %v290
    %v960 = vunpack.c.l.b16 %v291
    %v961 = vunpack.c.h.b16 %v291
    %v962 = vunpack.c.l.b16 %v292
    %v963 = vunpack.c.h.b16 %v292
    %v964 = vunpack.c.l.b16 %v293
    %v965 = vunpack.c.h.b16 %v293
    %v966 = vunpack.c.l.b16 %v294
    %v967 = vunpack.c.h.b16 %v294
    %v968 = vunpack.c.l.b16 %v295
    %v969 = vunpack.c.h.b16 %v295
    %v970 = vunpack.c.l.b16 %v296
    %v971 = vunpack.c.h.b16 %v296
    %v972 = vunpack.c.l.b16 %v297
    %v973 = vunpack.c.h.b16 %v297
    %v974 = vunpack.c.l.b16 %v298
    %v975 = vunpack.c.h.b16 %v298
    %v976 = vunpack.c.l.b16 %v299
    %v977 = vunpack.c.h.b16 %v299
    %v978 = vunpack.c.l.b16 %v300
    %v979 = vunpack.c.h.b16 %v300
    %v980 = vunpack.c.l.b16 %v301
    %v981 = vunpack.c.h.b16 %v301
    %v982 = vunpack.c.l.b16 %v302
    %v983 = vunpack.c.h.b16 %v302
    %v984 = vunpack.c.l.b16 %v303
    %v985 = vunpack.c.h.b16 %v303
    %v986 = vunpack.c.l.b16 %v304
    %v987 = vunpack.c.h.b16 %v304
    %v988 = vunpack.c.l.b16 %v305
    %v989 = vunpack.c.h.b16 %v305
    %v990 = vunpack.c.l.b16 %v306
    %v991 = vunpack.c.h.b16 %v306
    %v992 = vunpack.c.l.b16 %v307
    %v993 = vunpack.c.h.b16 %v307
    %v994 = vunpack.c.l.b16 %v308
    %v995 = vunpack.c.h.b16 %v308
    %v996 = vunpack.c.l.b16 %v309
    %v997 = vunpack.c.h.b16 %v309
    %v998 = vunpack.c.l.b16 %v310
    %v999 = vunpack.c.h.b16 %v310
    %v1000 = vunpack.c.l.b16 %v311
    %v1001 = vunpack.c.h.b16 %v311
    %v1002 = vunpack.c.l.b16 %v312
    %v1003 = vunpack.c.h.b16 %v312
    %v1004 = vunpack.c.l.b16 %v313
    %v1005 = vunpack.c.h.b16 %v313
    %v1006 = vunpack.c.l.b16 %v314
    %v1007 = vunpack.c.h.b16 %v314
    %v1008 = vunpack.c.l.b16 %v315
    %v1009 = vunpack.c.h.b16 %v315
    %v1010 = vunpack.c.l.b16 %v316
    %v1011 = vunpack.c.h.b16 %v316
    %v1012 = vunpack.c.l.b16 %v317
    %v1013 = vunpack.c.h.b16 %v317
    %v1014 = vunpack.c.l.b16 %v318
    %v1015 = vunpack.c.h.b16 %v318
    %v1016 = vunpack.c.l.b16 %v319
    %v1017 = vunpack.c.h.b16 %v319
    %v1018 = vunpack.c.l.b16 %v320
    %v1019 = vunpack.c.h.b16 %v320
    %v1020 = vunpack.c.l.b16 %v321
    %v1021 = vunpack.c.h.b16 %v321
    %v1022 = vunpack.c.l.b16 %v322
    %v1023 = vunpack.c.h.b16 %v322
    %v1024 = vunpack.c.l.b16 %v323
    %v1025 = vunpack.c.h.b16 %v323
    %v1026 = vunpack.c.l.b16 %v324
    %v1027 = vunpack.c.h.b16 %v324
    %v1028 = vunpack.c.l.b16 %v325
    %v1029 = vunpack.c.h.b16 %v325
    %v1030 = vunpack.c.l.b16 %v326
    %v1031 = vunpack.c.h.b16 %v326
    %v1032 = vunpack.c.l.b16 %v327
    %v1033 = vunpack.c.h.b16 %v327
    %v1034 = vunpack.c.l.b16 %v328
    %v1035 = vunpack.c.h.b16 %v328
    %v1036 = vunpack.c.l.b16 %v329
    %v1037 = vunpack.c.h.b16 %v329
    %v1038 = vunpack.c.l.b16 %v330
    %v1039 = vunpack.c.h.b16 %v330
    %v1040 = vunpack.c.l.b16 %v331
    %v1041 = vunpack.c.h.b16 %v331
    %v1042 = vunpack.c.l.b16 %v332
    %v1043 = vunpack.c.h.b16 %v332
    %v1044 = vunpack.c.l.b16 %v333
    %v1045 = vunpack.c.h.b16 %v333
    %v1046 = vunpack.c.l.b16 %v334
    %v1047 = vunpack.c.h.b16 %v334
    %v1048 = vunpack.c.l.b16 %v335
    %v1049 = vunpack.c.h.b16 %v335
    %v1050 = vunpack.c.l.b16 %v336
    %v1051 = vunpack.c.h.b16 %v336
    %v1052 = vunpack.c.l.b16 %v337
    %v1053 = vunpack.c.h.b16 %v337
    %v1054 = vunpack.c.l.b16 %v338
    %v1055 = vunpack.c.h.b16 %v338
    %v1056 = vunpack.c.l.b16 %v339
    %v1057 = vunpack.c.h.b16 %v339
    %v1058 = vunpack.c.l.b16 %v340
    %v1059 = vunpack.c.h.b16 %v340
    %v1060 = vunpack.c.l.b16 %v341
    %v1061 = vunpack.c.h.b16 %v341
    %v1062 = vunpack.c.l.b16 %v342
    %v1063 = vunpack.c.h.b16 %v342
    %v1064 = vunpack.c.l.b16 %v343
    %v1065 = vunpack.c.h.b16 %v343
    %v1066 = vunpack.c.l.b16 %v344
    %v1067 = vunpack.c.h.b16 %v344
    %v1068 = vunpack.c.l.b16 %v345
    %v1069 = vunpack.c.h.b16 %v345
    %v1070 = vunpack.c.l.b16 %v346
    %v1071 = vunpack.c.h.b16 %v346
    %v1072 = vunpack.c.l.b16 %v347
    %v1073 = vunpack.c.h.b16 %v347
    %v1074 = vunpack.c.l.b16 %v348
    %v1075 = vunpack.c.h.b16 %v348
    %v1076 = vunpack.c.l.b16 %v349
    %v1077 = vunpack.c.h.b16 %v349
    %v1078 = vunpack.c.l.b16 %v350
    %v1079 = vunpack.c.h.b16 %v350
    %v1080 = vunpack.c.l.b16 %v351
    %v1081 = vunpack.c.h.b16 %v351
    %v1082 = vunpack.c.l.b16 %v352
    %v1083 = vunpack.c.h.b16 %v352
    %v1084 = vunpack.c.l.b16 %v353
    %v1085 = vunpack.c.h.b16 %v353
    %v1086 = vunpack.c.l.b16 %v354
    %v1087 = vunpack.c.h.b16 %v354
    %v1088 = vunpack.c.l.b16 %v355
    %v1089 = vunpack.c.h.b16 %v355
    %v1090 = vunpack.c.l.b16 %v356
    %v1091 = vunpack.c.h.b16 %v356
    %v1092 = vunpack.c.l.b16 %v357
    %v1093 = vunpack.c.h.b16 %v357
    %v1094 = vunpack.c.l.b16 %v358
    %v1095 = vunpack.c.h.b16 %v358
    %v1096 = vunpack.c.l.b16 %v359
    %v1097 = vunpack.c.h.b16 %v359
    %v1098 = vunpack.c.l.b16 %v360
    %v1099 = vunpack.c.h.b16 %v360
    %v1100 = vunpack.c.l.b16 %v361
    %v1101 = vunpack.c.h.b16 %v361
    %v1102 = vunpack.c.l.b16 %v362
    %v1103 = vunpack.c.h.b16 %v362
    %v1104 = vunpack.c.l.b16 %v363
    %v1105 = vunpack.c.h.b16 %v363
    %v1106 = vunpack.c.l.b16 %v364
    %v1107 = vunpack.c.h.b16 %v364
    %v1108 = vunpack.c.l.b16 %v365
    %v1109 = vunpack.c.h.b16 %v365
    %v1110 = vunpack.c.l.b16 %v366
    %v1111 = vunpack.c.h.b16 %v366
    %v1112 = vunpack.c.l.b16 %v367
    %v1113 = vunpack.c.h.b16 %v367
    %v1114 = vunpack.c.l.b16 %v368
    %v1115 = vunpack.c.h.b16 %v368
    %v1116 = vunpack.c.l.b16 %v369
    %v1117 = vunpack.c.h.b16 %v369
    %v1118 = vunpack.c.l.b16 %v370
    %v1119 = vunpack.c.h.b16 %v370
    %v1120 = vunpack.c.l.b16 %v371
    %v1121 = vunpack.c.h.b16 %v371
    %v1122 = vunpack.c.l.b16 %v372
    %v1123 = vunpack.c.h.b16 %v372
    %v1124 = vunpack.c.l.b16 %v373
    %v1125 = vunpack.c.h.b16 %v373
    %v1126 = vunpack.c.l.b16 %v374
    %v1127 = vunpack.c.h.b16 %v374
    %v1128 = vunpack.c.l.b16 %v375
    %v1129 = vunpack.c.h.b16 %v375
    %v1130 = vunpack.c.l.b16 %v376
    %v1131 = vunpack.c.h.b16 %v376
    %v1132 = vunpack.c.l.b16 %v377
    %v1133 = vunpack.c.h.b16 %v377
    %v1134 = vunpack.c.l.b16 %v378
    %v1135 = vunpack.c.h.b16 %v378
    %v1136 = vunpack.c.l.b16 %v379
    %v1137 = vunpack.c.h.b16 %v379
    %v1138 = vunpack.c.l.b16 %v380
    %v1139 = vunpack.c.h.b16 %v380
    %v1140 = vunpack.c.l.b16 %v381
    %v1141 = vunpack.c.h.b16 %v381
    %v1142 = vunpack.c.l.b16 %v382
    %v1143 = vunpack.c.h.b16 %v382
    %v1144 = vunpack.c.l.b16 %v383
    %v1145 = vunpack.c.h.b16 %v383
    %v1146 = vunpack.c.l.b16 %v384
    %v1147 = vunpack.c.h.b16 %v384
    %v1148 = vunpack.c.l.b16 %v385
    %v1149 = vunpack.c.h.b16 %v385
    %v1150 = vunpack.c.l.b16 %v386
    %v1151 = vunpack.c.h.b16 %v386
    %v1152 = vunpack.c.l.b16 %v387
    %v1153 = vunpack.c.h.b16 %v387
    %v1154 = vunpack.c.l.b16 %v388
    %v1155 = vunpack.c.h.b16 %v388
    %v1156 = vunpack.c.l.b16 %v389
    %v1157 = vunpack.c.h.b16 %v389
    %v1158 = vunpack.c.l.b16 %v390
    %v1159 = vunpack.c.h.b16 %v390
    %v1160 = vunpack.c.l.b16 %v391
    %v1161 = vunpack.c.h.b16 %v391
    %v1162 = vunpack.c.l.b16 %v392
    %v1163 = vunpack.c.h.b16 %v392
    %v1164 = vunpack.c.l.b16 %v393
    %v1165 = vunpack.c.h.b16 %v393
    %v1166 = vunpack.c.l.b16 %v394
    %v1167 = vunpack.c.h.b16 %v394
    %v1168 = vunpack.c.l.b16 %v395
    %v1169 = vunpack.c.h.b16 %v395
    %v1170 = vunpack.c.l.b16 %v396
    %v1171 = vunpack.c.h.b16 %v396
    %v1172 = vunpack.c.l.b16 %v397
    %v1173 = vunpack.c.h.b16 %v397
    %v1174 = vunpack.c.l.b16 %v398
    %v1175 = vunpack.c.h.b16 %v398
    %v1176 = vunpack.c.l.b16 %v399
    %v1177 = vunpack.c.h.b16 %v399
    %v1178 = vpack.c.b16 %v670, %v666
    %v1179 = vpack.c.b16 %v671, %v667
    %v1180 = vpack.c.b16 %v672, %v668
    %v1181 = vpack.c.b16 %v673, %v669
    %v1182 = vpack.c.b16 %v678, %v674
    %v1183 = vpack.c.b16 %v679, %v675
    %v1184 = vpack.c.b16 %v680, %v676
    %v1185 = vpack.c.b16 %v681, %v677
    %v1186 = vpack.c.b16 %v686, %v682
    %v1187 = vpack.c.b16 %v687, %v683
    %v1188 = vpack.c.b16 %v688, %v684
    %v1189 = vpack.c.b16 %v689, %v685
    %v1190 = vpack.c.b16 %v694, %v690
    %v1191 = vpack.c.b16 %v695, %v691
    %v1192 = vpack.c.b16 %v696, %v692
    %v1193 = vpack.c.b16 %v697, %v693
    %v1194 = vpack.c.b16 %v702, %v698
    %v1195 = vpack.c.b16 %v703, %v699
    %v1196 = vpack.c.b16 %v704, %v700
    %v1197 = vpack.c.b16 %v705, %v701
    %v1198 = vpack.c.b16 %v710, %v706
    %v1199 = vpack.c.b16 %v711, %v707
    %v1200 = vpack.c.b16 %v712, %v708
    %v1201 = vpack.c.b16 %v713, %v709
    %v1202 = vpack.c.b16 %v718, %v714
    %v1203 = vpack.c.b16 %v719, %v715
    %v1204 = vpack.c.b16 %v720, %v716
    %v1205 = vpack.c.b16 %v721, %v717
    %v1206 = vpack.c.b16 %v726, %v722
    %v1207 = vpack.c.b16 %v727, %v723
    %v1208 = vpack.c.b16 %v728, %v724
    %v1209 = vpack.c.b16 %v729, %v725
    %v1210 = vpack.c.b16 %v734, %v730
    %v1211 = vpack.c.b16 %v735, %v731
    %v1212 = vpack.c.b16 %v736, %v732
    %v1213 = vpack.c.b16 %v737, %v733
    %v1214 = vpack.c.b16 %v742, %v738
    %v1215 = vpack.c.b16 %v743, %v739
    %v1216 = vpack.c.b16 %v744, %v740
    %v1217 = vpack.c.b16 %v745, %v741
    %v1218 = vpack.c.b16 %v750, %v746
    %v1219 = vpack.c.b16 %v751, %v747
    %v1220 = vpack.c.b16 %v752, %v748
    %v1221 = vpack.c.b16 %v753, %v749
    %v1222 = vpack.c.b16 %v758, %v754
    %v1223 = vpack.c.b16 %v759, %v755
    %v1224 = vpack.c.b16 %v760, %v756
    %v1225 = vpack.c.b16 %v761, %v757
    %v1226 = vpack.c.b16 %v766, %v762
    %v1227 = vpack.c.b16 %v767, %v763
    %v1228 = vpack.c.b16 %v768, %v764
    %v1229 = vpack.c.b16 %v769, %v765
    %v1230 = vpack.c.b16 %v774, %v770
    %v1231 = vpack.c.b16 %v775, %v771
    %v1232 = vpack.c.b16 %v776, %v772
    %v1233 = vpack.c.b16 %v777, %v773
    %v1234 = vpack.c.b16 %v782, %v778
    %v1235 = vpack.c.b16 %v783, %v779
    %v1236 = vpack.c.b16 %v784, %v780
    %v1237 = vpack.c.b16 %v785, %v781
    %v1238 = vpack.c.b16 %v790, %v786
    %v1239 = vpack.c.b16 %v791, %v787
    %v1240 = vpack.c.b16 %v792, %v788
    %v1241 = vpack.c.b16 %v793, %v789
    %v1242 = vpack.c.b16 %v798, %v794
    %v1243 = vpack.c.b16 %v799, %v795
    %v1244 = vpack.c.b16 %v800, %v796
    %v1245 = vpack.c.b16 %v801, %v797
    %v1246 = vpack.c.b16 %v806, %v802
    %v1247 = vpack.c.b16 %v807, %v803
    %v1248 = vpack.c.b16 %v808, %v804
    %v1249 = vpack.c.b16 %v809, %v805
    %v1250 = vpack.c.b16 %v814, %v810
    %v1251 = vpack.c.b16 %v815, %v811
    %v1252 = vpack.c.b16 %v816, %v812
    %v1253 = vpack.c.b16 %v817, %v813
    %v1254 = vpack.c.b16 %v822, %v818
    %v1255 = vpack.c.b16 %v823, %v819
    %v1256 = vpack.c.b16 %v824, %v820
    %v1257 = vpack.c.b16 %v825, %v821
    %v1258 = vpack.c.b16 %v830, %v826
    %v1259 = vpack.c.b16 %v831, %v827
    %v1260 = vpack.c.b16 %v832, %v828
    %v1261 = vpack.c.b16 %v833, %v829
    %v1262 = vpack.c.b16 %v838, %v834
    %v1263 = vpack.c.b16 %v839, %v835
    %v1264 = vpack.c.b16 %v840, %v836
    %v1265 = vpack.c.b16 %v841, %v837
    %v1266 = vpack.c.b16 %v846, %v842
    %v1267 = vpack.c.b16 %v847, %v843
    %v1268 = vpack.c.b16 %v848, %v844
    %v1269 = vpack.c.b16 %v849, %v845
    %v1270 = vpack.c.b16 %v854, %v850
    %v1271 = vpack.c.b16 %v855, %v851
    %v1272 = vpack.c.b16 %v856, %v852
    %v1273 = vpack.c.b16 %v857, %v853
    %v1274 = vpack.c.b16 %v862, %v858
    %v1275 = vpack.c.b16 %v863, %v859
    %v1276 = vpack.c.b16 %v864, %v860
    %v1277 = vpack.c.b16 %v865, %v861
    %v1278 = vpack.c.b16 %v870, %v866
    %v1279 = vpack.c.b16 %v871, %v867
    %v1280 = vpack.c.b16 %v872, %v868
    %v1281 = vpack.c.b16 %v873, %v869
    %v1282 = vpack.c.b16 %v878, %v874
    %v1283 = vpack.c.b16 %v879, %v875
    %v1284 = vpack.c.b16 %v880, %v876
    %v1285 = vpack.c.b16 %v881, %v877
    %v1286 = vpack.c.b16 %v886, %v882
    %v1287 = vpack.c.b16 %v887, %v883
    %v1288 = vpack.c.b16 %v888, %v884
    %v1289 = vpack.c.b16 %v889, %v885
    %v1290 = vpack.c.b16 %v894, %v890
    %v1291 = vpack.c.b16 %v895, %v891
    %v1292 = vpack.c.b16 %v896, %v892
    %v1293 = vpack.c.b16 %v897, %v893
    %v1294 = vpack.c.b16 %v902, %v898
    %v1295 = vpack.c.b16 %v903, %v899
    %v1296 = vpack.c.b16 %v904, %v900
    %v1297 = vpack.c.b16 %v905, %v901
    %v1298 = vpack.c.b16 %v910, %v906
    %v1299 = vpack.c.b16 %v911, %v907
    %v1300 = vpack.c.b16 %v912, %v908
    %v1301 = vpack.c.b16 %v913, %v909
    %v1302 = vpack.c.b16 %v918, %v914
    %v1303 = vpack.c.b16 %v919, %v915
    %v1304 = vpack.c.b16 %v920, %v916
    %v1305 = vpack.c.b16 %v921, %v917
    %v1306 = vpack.c.b16 %v926, %v922
    %v1307 = vpack.c.b16 %v927, %v923
    %v1308 = vpack.c.b16 %v928, %v924
    %v1309 = vpack.c.b16 %v929, %v925
    %v1310 = vpack.c.b16 %v934, %v930
    %v1311 = vpack.c.b16 %v935, %v931
    %v1312 = vpack.c.b16 %v936, %v932
    %v1313 = vpack.c.b16 %v937, %v933
    %v1314 = vpack.c.b16 %v942, %v938
    %v1315 = vpack.c.b16 %v943, %v939
    %v1316 = vpack.c.b16 %v944, %v940
    %v1317 = vpack.c.b16 %v945, %v941
    %v1318 = vpack.c.b16 %v950, %v946
    %v1319 = vpack.c.b16 %v951, %v947
    %v1320 = vpack.c.b16 %v952, %v948
    %v1321 = vpack.c.b16 %v953, %v949
    %v1322 = vpack.c.b16 %v958, %v954
    %v1323 = vpack.c.b16 %v959, %v955
    %v1324 = vpack.c.b16 %v960, %v956
    %v1325 = vpack.c.b16 %v961, %v957
    %v1326 = vpack.c.b16 %v966, %v962
    %v1327 = vpack.c.b16 %v967, %v963
    %v1328 = vpack.c.b16 %v968, %v964
    %v1329 = vpack.c.b16 %v969, %v965
    %v1330 = vpack.c.b16 %v974, %v970
    %v1331 = vpack.c.b16 %v975, %v971
    %v1332 = vpack.c.b16 %v976, %v972
    %v1333 = vpack.c.b16 %v977, %v973
    %v1334 = vpack.c.b16 %v982, %v978
    %v1335 = vpack.c.b16 %v983, %v979
    %v1336 = vpack.c.b16 %v984, %v980
    %v1337 = vpack.c.b16 %v985, %v981
    %v1338 = vpack.c.b16 %v990, %v986
    %v1339 = vpack.c.b16 %v991, %v987
    %v1340 = vpack.c.b16 %v992, %v988
    %v1341 = vpack.c.b16 %v993, %v989
    %v1342 = vpack.c.b16 %v998, %v994
    %v1343 = vpack.c.b16 %v999, %v995
    %v1344 = vpack.c.b16 %v1000, %v996
    %v1345 = vpack.c.b16 %v1001, %v997
    %v1346 = vpack.c.b16 %v1006, %v1002
    %v1347 = vpack.c.b16 %v1007, %v1003
    %v1348 = vpack.c.b16 %v1008, %v1004
    %v1349 = vpack.c.b16 %v1009, %v1005
    %v1350 = vpack.c.b16 %v1014, %v1010
    %v1351 = vpack.c.b16 %v1015, %v1011
    %v1352 = vpack.c.b16 %v1016, %v1012
    %v1353 = vpack.c.b16 %v1017, %v1013
    %v1354 = vpack.c.b16 %v1022, %v1018
    %v1355 = vpack.c.b16 %v1023, %v1019
    %v1356 = vpack.c.b16 %v1024, %v1020
    %v1357 = vpack.c.b16 %v1025, %v1021
    %v1358 = vpack.c.b16 %v1030, %v1026
    %v1359 = vpack.c.b16 %v1031, %v1027
    %v1360 = vpack.c.b16 %v1032, %v1028
    %v1361 = vpack.c.b16 %v1033, %v1029
    %v1362 = vpack.c.b16 %v1038, %v1034
    %v1363 = vpack.c.b16 %v1039, %v1035
    %v1364 = vpack.c.b16 %v1040, %v1036
    %v1365 = vpack.c.b16 %v1041, %v1037
    %v1366 = vpack.c.b16 %v1046, %v1042
    %v1367 = vpack.c.b16 %v1047, %v1043
    %v1368 = vpack.c.b16 %v1048, %v1044
    %v1369 = vpack.c.b16 %v1049, %v1045
    %v1370 = vpack.c.b16 %v1054, %v1050
    %v1371 = vpack.c.b16 %v1055, %v1051
    %v1372 = vpack.c.b16 %v1056, %v1052
    %v1373 = vpack.c.b16 %v1057, %v1053
    %v1374 = vpack.c.b16 %v1062, %v1058
    %v1375 = vpack.c.b16 %v1063, %v1059
    %v1376 = vpack.c.b16 %v1064, %v1060
    %v1377 = vpack.c.b16 %v1065, %v1061
    %v1378 = vpack.c.b16 %v1070, %v1066
    %v1379 = vpack.c.b16 %v1071, %v1067
    %v1380 = vpack.c.b16 %v1072, %v1068
    %v1381 = vpack.c.b16 %v1073, %v1069
    %v1382 = vpack.c.b16 %v1078, %v1074
    %v1383 = vpack.c.b16 %v1079, %v1075
    %v1384 = vpack.c.b16 %v1080, %v1076
    %v1385 = vpack.c.b16 %v1081, %v1077
    %v1386 = vpack.c.b16 %v1086, %v1082
    %v1387 = vpack.c.b16 %v1087, %v1083
    %v1388 = vpack.c.b16 %v1088, %v1084
    %v1389 = vpack.c.b16 %v1089, %v1085
    %v1390 = vpack.c.b16 %v1094, %v1090
    %v1391 = vpack.c.b16 %v1095, %v1091
    %v1392 = vpack.c.b16 %v1096, %v1092
    %v1393 = vpack.c.b16 %v1097, %v1093
    %v1394 = vpack.c.b16 %v1102, %v1098
    %v1395 = vpack.c.b16 %v1103, %v1099
    %v1396 = vpack.c.b16 %v1104, %v1100
    %v1397 = vpack.c.b16 %v1105, %v1101
    %v1398 = vpack.c.b16 %v1110, %v1106
    %v1399 = vpack.c.b16 %v1111, %v1107
    %v1400 = vpack.c.b16 %v1112, %v1108
    %v1401 = vpack.c.b16 %v1113, %v1109
    %v1402 = vpack.c.b16 %v1118, %v1114
    %v1403 = vpack.c.b16 %v1119, %v1115
    %v1404 = vpack.c.b16 %v1120, %v1116
    %v1405 = vpack.c.b16 %v1121, %v1117
    %v1406 = vpack.c.b16 %v1126, %v1122
    %v1407 = vpack.c.b16 %v1127, %v1123
    %v1408 = vpack.c.b16 %v1128, %v1124
    %v1409 = vpack.c.b16 %v1129, %v1125
    %v1410 = vpack.c.b16 %v1134, %v1130
    %v1411 = vpack.c.b16 %v1135, %v1131
    %v1412 = vpack.c.b16 %v1136, %v1132
    %v1413 = vpack.c.b16 %v1137, %v1133
    %v1414 = vpack.c.b16 %v1142, %v1138
    %v1415 = vpack.c.b16 %v1143, %v1139
    %v1416 = vpack.c.b16 %v1144, %v1140
    %v1417 = vpack.c.b16 %v1145, %v1141
    %v1418 = vpack.c.b16 %v1150, %v1146
    %v1419 = vpack.c.b16 %v1151, %v1147
    %v1420 = vpack.c.b16 %v1152, %v1148
    %v1421 = vpack.c.b16 %v1153, %v1149
    %v1422 = vpack.c.b16 %v1158, %v1154
    %v1423 = vpack.c.b16 %v1159, %v1155
    %v1424 = vpack.c.b16 %v1160, %v1156
    %v1425 = vpack.c.b16 %v1161, %v1157
    %v1426 = vpack.c.b16 %v1166, %v1162
    %v1427 = vpack.c.b16 %v1167, %v1163
    %v1428 = vpack.c.b16 %v1168, %v1164
    %v1429 = vpack.c.b16 %v1169, %v1165
    %v1430 = vpack.c.b16 %v1174, %v1170
    %v1431 = vpack.c.b16 %v1175, %v1171
    %v1432 = vpack.c.b16 %v1176, %v1172
    %v1433 = vpack.c.b16 %v1177, %v1173
    %1690 = vmatpush.bf16.msra.mxu0 %v1206
    %1691 = vmatpush.bf16.msra.mxu0 %v1202
    %1692 = vmatpush.bf16.msra.mxu0 %v1198
    %1693 = vmatpush.bf16.msra.mxu0 %v1194
    %1694 = vmatpush.bf16.msra.mxu0 %v1190
    %1695 = vmatpush.bf16.msra.mxu0 %v1186
    %1696 = vmatpush.bf16.msra.mxu0 %v1182
    %1697 = vmatpush.bf16.msra.mxu0 %v1178
    %1698 = vmatmul.bf16.gmra.mxu0 %v136
    %v1699 = vpop.f32.mrf.mxu0
    %v1700 = vadd.f32 %v402, %v1699
    %v1701 = vpop.f32.mrf.mxu0
    %1702 = vdwg.mxu0
    %1703 = vmatpush.bf16.msra.mxu0 %v1238
    %1704 = vmatpush.bf16.msra.mxu0 %v1234
    %1705 = vmatpush.bf16.msra.mxu0 %v1230
    %1706 = vmatpush.bf16.msra.mxu0 %v1226
    %1707 = vmatpush.bf16.msra.mxu0 %v1222
    %1708 = vmatpush.bf16.msra.mxu0 %v1218
    %1709 = vmatpush.bf16.msra.mxu0 %v1214
    %1710 = vmatpush.bf16.msra.mxu0 %v1210
    %1711 = vmatmul.bf16.gmra.mxu0 %v137
    %v1712 = vpop.f32.mrf.mxu0
    %v1713 = vadd.f32 %v1700, %v1712
    %v1714 = vpop.f32.mrf.mxu0
    %1715 = vdwg.mxu0
    %1716 = vmatpush.bf16.msra.mxu0 %v1270
    %1717 = vmatpush.bf16.msra.mxu0 %v1266
    %1718 = vmatpush.bf16.msra.mxu0 %v1262
    %1719 = vmatpush.bf16.msra.mxu0 %v1258
    %1720 = vmatpush.bf16.msra.mxu0 %v1254
    %1721 = vmatpush.bf16.msra.mxu0 %v1250
    %1722 = vmatpush.bf16.msra.mxu0 %v1246
    %1723 = vmatpush.bf16.msra.mxu0 %v1242
    %1724 = vmatmul.bf16.gmra.mxu0 %v138
    %v1725 = vpop.f32.mrf.mxu0
    %v1726 = vadd.f32 %v1713, %v1725
    %v1727 = vpop.f32.mrf.mxu0
    %1728 = vdwg.mxu0
    %1729 = vmatpush.bf16.msra.mxu0 %v1302
    %1730 = vmatpush.bf16.msra.mxu0 %v1298
    %1731 = vmatpush.bf16.msra.mxu0 %v1294
    %1732 = vmatpush.bf16.msra.mxu0 %v1290
    %1733 = vmatpush.bf16.msra.mxu0 %v1286
    %1734 = vmatpush.bf16.msra.mxu0 %v1282
    %1735 = vmatpush.bf16.msra.mxu0 %v1278
    %1736 = vmatpush.bf16.msra.mxu0 %v1274
    %1737 = vmatmul.bf16.gmra.mxu0 %v139
    %v1738 = vpop.f32.mrf.mxu0
    %v1739 = vadd.f32 %v1726, %v1738
    %v1740 = vpop.f32.mrf.mxu0
    %1741 = vdwg.mxu0
    %1742 = vmatpush.bf16.msra.mxu0 %v1334
    %1743 = vmatpush.bf16.msra.mxu0 %v1330
    %1744 = vmatpush.bf16.msra.mxu0 %v1326
    %1745 = vmatpush.bf16.msra.mxu0 %v1322
    %1746 = vmatpush.bf16.msra.mxu0 %v1318
    %1747 = vmatpush.bf16.msra.mxu0 %v1314
    %1748 = vmatpush.bf16.msra.mxu0 %v1310
    %1749 = vmatpush.bf16.msra.mxu0 %v1306
    %1750 = vmatmul.bf16.gmra.mxu0 %v140
    %v1751 = vpop.f32.mrf.mxu0
    %v1752 = vadd.f32 %v1739, %v1751
    %v1753 = vpop.f32.mrf.mxu0
    %1754 = vdwg.mxu0
    %1755 = vmatpush.bf16.msra.mxu0 %v1366
    %1756 = vmatpush.bf16.msra.mxu0 %v1362
    %1757 = vmatpush.bf16.msra.mxu0 %v1358
    %1758 = vmatpush.bf16.msra.mxu0 %v1354
    %1759 = vmatpush.bf16.msra.mxu0 %v1350
    %1760 = vmatpush.bf16.msra.mxu0 %v1346
    %1761 = vmatpush.bf16.msra.mxu0 %v1342
    %1762 = vmatpush.bf16.msra.mxu0 %v1338
    %1763 = vmatmul.bf16.gmra.mxu0 %v141
    %v1764 = vpop.f32.mrf.mxu0
    %v1765 = vadd.f32 %v1752, %v1764
    %v1766 = vpop.f32.mrf.mxu0
    %1767 = vdwg.mxu0
    %1768 = vmatpush.bf16.msra.mxu0 %v1398
    %1769 = vmatpush.bf16.msra.mxu0 %v1394
    %1770 = vmatpush.bf16.msra.mxu0 %v1390
    %1771 = vmatpush.bf16.msra.mxu0 %v1386
    %1772 = vmatpush.bf16.msra.mxu0 %v1382
    %1773 = vmatpush.bf16.msra.mxu0 %v1378
    %1774 = vmatpush.bf16.msra.mxu0 %v1374
    %1775 = vmatpush.bf16.msra.mxu0 %v1370
    %1776 = vmatmul.bf16.gmra.mxu0 %v142
    %v1777 = vpop.f32.mrf.mxu0
    %v1778 = vadd.f32 %v1765, %v1777
    %v1779 = vpop.f32.mrf.mxu0
    %1780 = vdwg.mxu0
    %1781 = vmatpush.bf16.msra.mxu0 %v1430
    %1782 = vmatpush.bf16.msra.mxu0 %v1426
    %1783 = vmatpush.bf16.msra.mxu0 %v1422
    %1784 = vmatpush.bf16.msra.mxu0 %v1418
    %1785 = vmatpush.bf16.msra.mxu0 %v1414
    %1786 = vmatpush.bf16.msra.mxu0 %v1410
    %1787 = vmatpush.bf16.msra.mxu0 %v1406
    %1788 = vmatpush.bf16.msra.mxu0 %v1402
    %1789 = vmatmul.bf16.gmra.mxu0 %v143
    %v1790 = vpop.f32.mrf.mxu0
    %v1791 = vadd.f32 %v1778, %v1790
    %v1792 = vpop.f32.mrf.mxu0
    %1793 = vdwg.mxu0
    %1794 = vmatpush.bf16.msra.mxu0 %v1207
    %1795 = vmatpush.bf16.msra.mxu0 %v1203
    %1796 = vmatpush.bf16.msra.mxu0 %v1199
    %1797 = vmatpush.bf16.msra.mxu0 %v1195
    %1798 = vmatpush.bf16.msra.mxu0 %v1191
    %1799 = vmatpush.bf16.msra.mxu0 %v1187
    %1800 = vmatpush.bf16.msra.mxu0 %v1183
    %1801 = vmatpush.bf16.msra.mxu0 %v1179
    %1802 = vmatmul.bf16.gmra.mxu0 %v136
    %v1803 = vpop.f32.mrf.mxu0
    %v1804 = vadd.f32 %v403, %v1803
    %v1805 = vpop.f32.mrf.mxu0
    %1806 = vdwg.mxu0
    %1807 = vmatpush.bf16.msra.mxu0 %v1239
    %1808 = vmatpush.bf16.msra.mxu0 %v1235
    %1809 = vmatpush.bf16.msra.mxu0 %v1231
    %1810 = vmatpush.bf16.msra.mxu0 %v1227
    %1811 = vmatpush.bf16.msra.mxu0 %v1223
    %1812 = vmatpush.bf16.msra.mxu0 %v1219
    %1813 = vmatpush.bf16.msra.mxu0 %v1215
    %1814 = vmatpush.bf16.msra.mxu0 %v1211
    %1815 = vmatmul.bf16.gmra.mxu0 %v137
    %v1816 = vpop.f32.mrf.mxu0
    %v1817 = vadd.f32 %v1804, %v1816
    %v1818 = vpop.f32.mrf.mxu0
    %1819 = vdwg.mxu0
    %1820 = vmatpush.bf16.msra.mxu0 %v1271
    %1821 = vmatpush.bf16.msra.mxu0 %v1267
    %1822 = vmatpush.bf16.msra.mxu0 %v1263
    %1823 = vmatpush.bf16.msra.mxu0 %v1259
    %1824 = vmatpush.bf16.msra.mxu0 %v1255
    %1825 = vmatpush.bf16.msra.mxu0 %v1251
    %1826 = vmatpush.bf16.msra.mxu0 %v1247
    %1827 = vmatpush.bf16.msra.mxu0 %v1243
    %1828 = vmatmul.bf16.gmra.mxu0 %v138
    %v1829 = vpop.f32.mrf.mxu0
    %v1830 = vadd.f32 %v1817, %v1829
    %v1831 = vpop.f32.mrf.mxu0
    %1832 = vdwg.mxu0
    %1833 = vmatpush.bf16.msra.mxu0 %v1303
    %1834 = vmatpush.bf16.msra.mxu0 %v1299
    %1835 = vmatpush.bf16.msra.mxu0 %v1295
    %1836 = vmatpush.bf16.msra.mxu0 %v1291
    %1837 = vmatpush.bf16.msra.mxu0 %v1287
    %1838 = vmatpush.bf16.msra.mxu0 %v1283
    %1839 = vmatpush.bf16.msra.mxu0 %v1279
    %1840 = vmatpush.bf16.msra.mxu0 %v1275
    %1841 = vmatmul.bf16.gmra.mxu0 %v139
    %v1842 = vpop.f32.mrf.mxu0
    %v1843 = vadd.f32 %v1830, %v1842
    %v1844 = vpop.f32.mrf.mxu0
    %1845 = vdwg.mxu0
    %1846 = vmatpush.bf16.msra.mxu0 %v1335
    %1847 = vmatpush.bf16.msra.mxu0 %v1331
    %1848 = vmatpush.bf16.msra.mxu0 %v1327
    %1849 = vmatpush.bf16.msra.mxu0 %v1323
    %1850 = vmatpush.bf16.msra.mxu0 %v1319
    %1851 = vmatpush.bf16.msra.mxu0 %v1315
    %1852 = vmatpush.bf16.msra.mxu0 %v1311
    %1853 = vmatpush.bf16.msra.mxu0 %v1307
    %1854 = vmatmul.bf16.gmra.mxu0 %v140
    %v1855 = vpop.f32.mrf.mxu0
    %v1856 = vadd.f32 %v1843, %v1855
    %v1857 = vpop.f32.mrf.mxu0
    %1858 = vdwg.mxu0
    %1859 = vmatpush.bf16.msra.mxu0 %v1367
    %1860 = vmatpush.bf16.msra.mxu0 %v1363
    %1861 = vmatpush.bf16.msra.mxu0 %v1359
    %1862 = vmatpush.bf16.msra.mxu0 %v1355
    %1863 = vmatpush.bf16.msra.mxu0 %v1351
    %1864 = vmatpush.bf16.msra.mxu0 %v1347
    %1865 = vmatpush.bf16.msra.mxu0 %v1343
    %1866 = vmatpush.bf16.msra.mxu0 %v1339
    %1867 = vmatmul.bf16.gmra.mxu0 %v141
    %v1868 = vpop.f32.mrf.mxu0
    %v1869 = vadd.f32 %v1856, %v1868
    %v1870 = vpop.f32.mrf.mxu0
    %1871 = vdwg.mxu0
    %1872 = vmatpush.bf16.msra.mxu0 %v1399
    %1873 = vmatpush.bf16.msra.mxu0 %v1395
    %1874 = vmatpush.bf16.msra.mxu0 %v1391
    %1875 = vmatpush.bf16.msra.mxu0 %v1387
    %1876 = vmatpush.bf16.msra.mxu0 %v1383
    %1877 = vmatpush.bf16.msra.mxu0 %v1379
    %1878 = vmatpush.bf16.msra.mxu0 %v1375
    %1879 = vmatpush.bf16.msra.mxu0 %v1371
    %1880 = vmatmul.bf16.gmra.mxu0 %v142
    %v1881 = vpop.f32.mrf.mxu0
    %v1882 = vadd.f32 %v1869, %v1881
    %v1883 = vpop.f32.mrf.mxu0
    %1884 = vdwg.mxu0
    %1885 = vmatpush.bf16.msra.mxu0 %v1431
    %1886 = vmatpush.bf16.msra.mxu0 %v1427
    %1887 = vmatpush.bf16.msra.mxu0 %v1423
    %1888 = vmatpush.bf16.msra.mxu0 %v1419
    %1889 = vmatpush.bf16.msra.mxu0 %v1415
    %1890 = vmatpush.bf16.msra.mxu0 %v1411
    %1891 = vmatpush.bf16.msra.mxu0 %v1407
    %1892 = vmatpush.bf16.msra.mxu0 %v1403
    %1893 = vmatmul.bf16.gmra.mxu0 %v143
    %v1894 = vpop.f32.mrf.mxu0
    %v1895 = vadd.f32 %v1882, %v1894
    %v1896 = vpop.f32.mrf.mxu0
    %1897 = vdwg.mxu0
    %1898 = vmatpush.bf16.msra.mxu0 %v1208
    %1899 = vmatpush.bf16.msra.mxu0 %v1204
    %1900 = vmatpush.bf16.msra.mxu0 %v1200
    %1901 = vmatpush.bf16.msra.mxu0 %v1196
    %1902 = vmatpush.bf16.msra.mxu0 %v1192
    %1903 = vmatpush.bf16.msra.mxu0 %v1188
    %1904 = vmatpush.bf16.msra.mxu0 %v1184
    %1905 = vmatpush.bf16.msra.mxu0 %v1180
    %1906 = vmatmul.bf16.gmra.mxu0 %v136
    %v1907 = vpop.f32.mrf.mxu0
    %v1908 = vadd.f32 %v404, %v1907
    %v1909 = vpop.f32.mrf.mxu0
    %1910 = vdwg.mxu0
    %1911 = vmatpush.bf16.msra.mxu0 %v1240
    %1912 = vmatpush.bf16.msra.mxu0 %v1236
    %1913 = vmatpush.bf16.msra.mxu0 %v1232
    %1914 = vmatpush.bf16.msra.mxu0 %v1228
    %1915 = vmatpush.bf16.msra.mxu0 %v1224
    %1916 = vmatpush.bf16.msra.mxu0 %v1220
    %1917 = vmatpush.bf16.msra.mxu0 %v1216
    %1918 = vmatpush.bf16.msra.mxu0 %v1212
    %1919 = vmatmul.bf16.gmra.mxu0 %v137
    %v1920 = vpop.f32.mrf.mxu0
    %v1921 = vadd.f32 %v1908, %v1920
    %v1922 = vpop.f32.mrf.mxu0
    %1923 = vdwg.mxu0
    %1924 = vmatpush.bf16.msra.mxu0 %v1272
    %1925 = vmatpush.bf16.msra.mxu0 %v1268
    %1926 = vmatpush.bf16.msra.mxu0 %v1264
    %1927 = vmatpush.bf16.msra.mxu0 %v1260
    %1928 = vmatpush.bf16.msra.mxu0 %v1256
    %1929 = vmatpush.bf16.msra.mxu0 %v1252
    %1930 = vmatpush.bf16.msra.mxu0 %v1248
    %1931 = vmatpush.bf16.msra.mxu0 %v1244
    %1932 = vmatmul.bf16.gmra.mxu0 %v138
    %v1933 = vpop.f32.mrf.mxu0
    %v1934 = vadd.f32 %v1921, %v1933
    %v1935 = vpop.f32.mrf.mxu0
    %1936 = vdwg.mxu0
    %1937 = vmatpush.bf16.msra.mxu0 %v1304
    %1938 = vmatpush.bf16.msra.mxu0 %v1300
    %1939 = vmatpush.bf16.msra.mxu0 %v1296
    %1940 = vmatpush.bf16.msra.mxu0 %v1292
    %1941 = vmatpush.bf16.msra.mxu0 %v1288
    %1942 = vmatpush.bf16.msra.mxu0 %v1284
    %1943 = vmatpush.bf16.msra.mxu0 %v1280
    %1944 = vmatpush.bf16.msra.mxu0 %v1276
    %1945 = vmatmul.bf16.gmra.mxu0 %v139
    %v1946 = vpop.f32.mrf.mxu0
    %v1947 = vadd.f32 %v1934, %v1946
    %v1948 = vpop.f32.mrf.mxu0
    %1949 = vdwg.mxu0
    %1950 = vmatpush.bf16.msra.mxu0 %v1336
    %1951 = vmatpush.bf16.msra.mxu0 %v1332
    %1952 = vmatpush.bf16.msra.mxu0 %v1328
    %1953 = vmatpush.bf16.msra.mxu0 %v1324
    %1954 = vmatpush.bf16.msra.mxu0 %v1320
    %1955 = vmatpush.bf16.msra.mxu0 %v1316
    %1956 = vmatpush.bf16.msra.mxu0 %v1312
    %1957 = vmatpush.bf16.msra.mxu0 %v1308
    %1958 = vmatmul.bf16.gmra.mxu0 %v140
    %v1959 = vpop.f32.mrf.mxu0
    %v1960 = vadd.f32 %v1947, %v1959
    %v1961 = vpop.f32.mrf.mxu0
    %1962 = vdwg.mxu0
    %1963 = vmatpush.bf16.msra.mxu0 %v1368
    %1964 = vmatpush.bf16.msra.mxu0 %v1364
    %1965 = vmatpush.bf16.msra.mxu0 %v1360
    %1966 = vmatpush.bf16.msra.mxu0 %v1356
    %1967 = vmatpush.bf16.msra.mxu0 %v1352
    %1968 = vmatpush.bf16.msra.mxu0 %v1348
    %1969 = vmatpush.bf16.msra.mxu0 %v1344
    %1970 = vmatpush.bf16.msra.mxu0 %v1340
    %1971 = vmatmul.bf16.gmra.mxu0 %v141
    %v1972 = vpop.f32.mrf.mxu0
    %v1973 = vadd.f32 %v1960, %v1972
    %v1974 = vpop.f32.mrf.mxu0
    %1975 = vdwg.mxu0
    %1976 = vmatpush.bf16.msra.mxu0 %v1400
    %1977 = vmatpush.bf16.msra.mxu0 %v1396
    %1978 = vmatpush.bf16.msra.mxu0 %v1392
    %1979 = vmatpush.bf16.msra.mxu0 %v1388
    %1980 = vmatpush.bf16.msra.mxu0 %v1384
    %1981 = vmatpush.bf16.msra.mxu0 %v1380
    %1982 = vmatpush.bf16.msra.mxu0 %v1376
    %1983 = vmatpush.bf16.msra.mxu0 %v1372
    %1984 = vmatmul.bf16.gmra.mxu0 %v142
    %v1985 = vpop.f32.mrf.mxu0
    %v1986 = vadd.f32 %v1973, %v1985
    %v1987 = vpop.f32.mrf.mxu0
    %1988 = vdwg.mxu0
    %1989 = vmatpush.bf16.msra.mxu0 %v1432
    %1990 = vmatpush.bf16.msra.mxu0 %v1428
    %1991 = vmatpush.bf16.msra.mxu0 %v1424
    %1992 = vmatpush.bf16.msra.mxu0 %v1420
    %1993 = vmatpush.bf16.msra.mxu0 %v1416
    %1994 = vmatpush.bf16.msra.mxu0 %v1412
    %1995 = vmatpush.bf16.msra.mxu0 %v1408
    %1996 = vmatpush.bf16.msra.mxu0 %v1404
    %1997 = vmatmul.bf16.gmra.mxu0 %v143
    %v1998 = vpop.f32.mrf.mxu0
    %v1999 = vadd.f32 %v1986, %v1998
    %v2000 = vpop.f32.mrf.mxu0
    %2001 = vdwg.mxu0
    %2002 = vmatpush.bf16.msra.mxu0 %v1209
    %2003 = vmatpush.bf16.msra.mxu0 %v1205
    %2004 = vmatpush.bf16.msra.mxu0 %v1201
    %2005 = vmatpush.bf16.msra.mxu0 %v1197
    %2006 = vmatpush.bf16.msra.mxu0 %v1193
    %2007 = vmatpush.bf16.msra.mxu0 %v1189
    %2008 = vmatpush.bf16.msra.mxu0 %v1185
    %2009 = vmatpush.bf16.msra.mxu0 %v1181
    %2010 = vmatmul.bf16.gmra.mxu0 %v136
    %v2011 = vpop.f32.mrf.mxu0
    %v2012 = vadd.f32 %v405, %v2011
    %v2013 = vpop.f32.mrf.mxu0
    %2014 = vdwg.mxu0
    %2015 = vmatpush.bf16.msra.mxu0 %v1241
    %2016 = vmatpush.bf16.msra.mxu0 %v1237
    %2017 = vmatpush.bf16.msra.mxu0 %v1233
    %2018 = vmatpush.bf16.msra.mxu0 %v1229
    %2019 = vmatpush.bf16.msra.mxu0 %v1225
    %2020 = vmatpush.bf16.msra.mxu0 %v1221
    %2021 = vmatpush.bf16.msra.mxu0 %v1217
    %2022 = vmatpush.bf16.msra.mxu0 %v1213
    %2023 = vmatmul.bf16.gmra.mxu0 %v137
    %v2024 = vpop.f32.mrf.mxu0
    %v2025 = vadd.f32 %v2012, %v2024
    %v2026 = vpop.f32.mrf.mxu0
    %2027 = vdwg.mxu0
    %2028 = vmatpush.bf16.msra.mxu0 %v1273
    %2029 = vmatpush.bf16.msra.mxu0 %v1269
    %2030 = vmatpush.bf16.msra.mxu0 %v1265
    %2031 = vmatpush.bf16.msra.mxu0 %v1261
    %2032 = vmatpush.bf16.msra.mxu0 %v1257
    %2033 = vmatpush.bf16.msra.mxu0 %v1253
    %2034 = vmatpush.bf16.msra.mxu0 %v1249
    %2035 = vmatpush.bf16.msra.mxu0 %v1245
    %2036 = vmatmul.bf16.gmra.mxu0 %v138
    %v2037 = vpop.f32.mrf.mxu0
    %v2038 = vadd.f32 %v2025, %v2037
    %v2039 = vpop.f32.mrf.mxu0
    %2040 = vdwg.mxu0
    %2041 = vmatpush.bf16.msra.mxu0 %v1305
    %2042 = vmatpush.bf16.msra.mxu0 %v1301
    %2043 = vmatpush.bf16.msra.mxu0 %v1297
    %2044 = vmatpush.bf16.msra.mxu0 %v1293
    %2045 = vmatpush.bf16.msra.mxu0 %v1289
    %2046 = vmatpush.bf16.msra.mxu0 %v1285
    %2047 = vmatpush.bf16.msra.mxu0 %v1281
    %2048 = vmatpush.bf16.msra.mxu0 %v1277
    %2049 = vmatmul.bf16.gmra.mxu0 %v139
    %v2050 = vpop.f32.mrf.mxu0
    %v2051 = vadd.f32 %v2038, %v2050
    %v2052 = vpop.f32.mrf.mxu0
    %2053 = vdwg.mxu0
    %2054 = vmatpush.bf16.msra.mxu0 %v1337
    %2055 = vmatpush.bf16.msra.mxu0 %v1333
    %2056 = vmatpush.bf16.msra.mxu0 %v1329
    %2057 = vmatpush.bf16.msra.mxu0 %v1325
    %2058 = vmatpush.bf16.msra.mxu0 %v1321
    %2059 = vmatpush.bf16.msra.mxu0 %v1317
    %2060 = vmatpush.bf16.msra.mxu0 %v1313
    %2061 = vmatpush.bf16.msra.mxu0 %v1309
    %2062 = vmatmul.bf16.gmra.mxu0 %v140
    %v2063 = vpop.f32.mrf.mxu0
    %v2064 = vadd.f32 %v2051, %v2063
    %v2065 = vpop.f32.mrf.mxu0
    %2066 = vdwg.mxu0
    %2067 = vmatpush.bf16.msra.mxu0 %v1369
    %2068 = vmatpush.bf16.msra.mxu0 %v1365
    %2069 = vmatpush.bf16.msra.mxu0 %v1361
    %2070 = vmatpush.bf16.msra.mxu0 %v1357
    %2071 = vmatpush.bf16.msra.mxu0 %v1353
    %2072 = vmatpush.bf16.msra.mxu0 %v1349
    %2073 = vmatpush.bf16.msra.mxu0 %v1345
    %2074 = vmatpush.bf16.msra.mxu0 %v1341
    %2075 = vmatmul.bf16.gmra.mxu0 %v141
    %v2076 = vpop.f32.mrf.mxu0
    %v2077 = vadd.f32 %v2064, %v2076
    %v2078 = vpop.f32.mrf.mxu0
    %2079 = vdwg.mxu0
    %2080 = vmatpush.bf16.msra.mxu0 %v1401
    %2081 = vmatpush.bf16.msra.mxu0 %v1397
    %2082 = vmatpush.bf16.msra.mxu0 %v1393
    %2083 = vmatpush.bf16.msra.mxu0 %v1389
    %2084 = vmatpush.bf16.msra.mxu0 %v1385
    %2085 = vmatpush.bf16.msra.mxu0 %v1381
    %2086 = vmatpush.bf16.msra.mxu0 %v1377
    %2087 = vmatpush.bf16.msra.mxu0 %v1373
    %2088 = vmatmul.bf16.gmra.mxu0 %v142
    %v2089 = vpop.f32.mrf.mxu0
    %v2090 = vadd.f32 %v2077, %v2089
    %v2091 = vpop.f32.mrf.mxu0
    %2092 = vdwg.mxu0
    %2093 = vmatpush.bf16.msra.mxu0 %v1433
    %2094 = vmatpush.bf16.msra.mxu0 %v1429
    %2095 = vmatpush.bf16.msra.mxu0 %v1425
    %2096 = vmatpush.bf16.msra.mxu0 %v1421
    %2097 = vmatpush.bf16.msra.mxu0 %v1417
    %2098 = vmatpush.bf16.msra.mxu0 %v1413
    %2099 = vmatpush.bf16.msra.mxu0 %v1409
    %2100 = vmatpush.bf16.msra.mxu0 %v1405
    %2101 = vmatmul.bf16.gmra.mxu0 %v143
    %v2102 = vpop.f32.mrf.mxu0
    %v2103 = vadd.f32 %v2090, %v2102
    %v2104 = vpop.f32.mrf.mxu0
    %2105 = vdwg.mxu0
    %vm2106 = vcmp.gt.f32.partialorder %v1791, 0.0
    %vm2107 = vcmp.gt.f32.partialorder %v1895, 0.0
    %vm2108 = vcmp.gt.f32.partialorder %v1999, 0.0
    %vm2109 = vcmp.gt.f32.partialorder %v2103, 0.0
    %v2110 = vmul.f32 %v1791, 0.2
    %v2111 = vmul.f32 %v1895, 0.2
    %v2112 = vmul.f32 %v1999, 0.2
    %v2113 = vmul.f32 %v2103, 0.2
    %v2114 = vsel %vm2106, %v1791, %v2110
    %v2115 = vsel %vm2107, %v1895, %v2111
    %v2116 = vsel %vm2108, %v1999, %v2112
    %v2117 = vsel %vm2109, %v2103, %v2113
    %v2118 = vpack.c.bf16 %v2114, %v2114
    %v2119 = vpack.c.bf16 %v2115, %v2115
    %v2120 = vpack.c.bf16 %v2116, %v2116
    %v2121 = vpack.c.bf16 %v2117, %v2117
    %v2122 = vld [vmem:[#allocation9] sm:$0xff]
    %v2123 = vld [vmem:[#allocation9 + $0x8] sm:$0xff]
    %v2124 = vld [vmem:[#allocation9 + $0x10] sm:$0xff]
    %v2125 = vld [vmem:[#allocation9 + $0x18] sm:$0xff]
    %v2126 = vld [vmem:[#allocation9 + $0x20] sm:$0xff]
    %v2127 = vld [vmem:[#allocation9 + $0x28] sm:$0xff]
    %v2128 = vld [vmem:[#allocation9 + $0x30] sm:$0xff]
    %v2129 = vld [vmem:[#allocation9 + $0x38] sm:$0xff]
    %v2130 = vld [vmem:[#allocation9 + $0x40] sm:$0xff]
    %v2131 = vld [vmem:[#allocation9 + $0x48] sm:$0xff]
    %v2132 = vld [vmem:[#allocation9 + $0x50] sm:$0xff]
    %v2133 = vld [vmem:[#allocation9 + $0x58] sm:$0xff]
    %v2134 = vld [vmem:[#allocation9 + $0x60] sm:$0xff]
    %v2135 = vld [vmem:[#allocation9 + $0x68] sm:$0xff]
    %v2136 = vld [vmem:[#allocation9 + $0x70] sm:$0xff]
    %v2137 = vld [vmem:[#allocation9 + $0x78] sm:$0xff]
    %v2138 = vld [vmem:[#allocation9 + $0x80] sm:$0xff]
    %v2139 = vld [vmem:[#allocation9 + $0x88] sm:$0xff]
    %v2140 = vld [vmem:[#allocation9 + $0x90] sm:$0xff]
    %v2141 = vld [vmem:[#allocation9 + $0x98] sm:$0xff]
    %v2142 = vld [vmem:[#allocation9 + $0xa0] sm:$0xff]
    %v2143 = vld [vmem:[#allocation9 + $0xa8] sm:$0xff]
    %v2144 = vld [vmem:[#allocation9 + $0xb0] sm:$0xff]
    %v2145 = vld [vmem:[#allocation9 + $0xb8] sm:$0xff]
    %v2146 = vld [vmem:[#allocation9 + $0xc0] sm:$0xff]
    %v2147 = vld [vmem:[#allocation9 + $0xc8] sm:$0xff]
    %v2148 = vld [vmem:[#allocation9 + $0xd0] sm:$0xff]
    %v2149 = vld [vmem:[#allocation9 + $0xd8] sm:$0xff]
    %v2150 = vld [vmem:[#allocation9 + $0xe0] sm:$0xff]
    %v2151 = vld [vmem:[#allocation9 + $0xe8] sm:$0xff]
    %v2152 = vld [vmem:[#allocation9 + $0xf0] sm:$0xff]
    %v2153 = vld [vmem:[#allocation9 + $0xf8] sm:$0xff]
    %v2154 = vld [vmem:[#allocation9 + $0x100] sm:$0xff]
    %v2155 = vld [vmem:[#allocation9 + $0x108] sm:$0xff]
    %v2156 = vld [vmem:[#allocation9 + $0x110] sm:$0xff]
    %v2157 = vld [vmem:[#allocation9 + $0x118] sm:$0xff]
    %v2158 = vld [vmem:[#allocation9 + $0x120] sm:$0xff]
    %v2159 = vld [vmem:[#allocation9 + $0x128] sm:$0xff]
    %v2160 = vld [vmem:[#allocation9 + $0x130] sm:$0xff]
    %v2161 = vld [vmem:[#allocation9 + $0x138] sm:$0xff]
    %v2162 = vld [vmem:[#allocation9 + $0x140] sm:$0xff]
    %v2163 = vld [vmem:[#allocation9 + $0x148] sm:$0xff]
    %v2164 = vld [vmem:[#allocation9 + $0x150] sm:$0xff]
    %v2165 = vld [vmem:[#allocation9 + $0x158] sm:$0xff]
    %v2166 = vld [vmem:[#allocation9 + $0x160] sm:$0xff]
    %v2167 = vld [vmem:[#allocation9 + $0x168] sm:$0xff]
    %v2168 = vld [vmem:[#allocation9 + $0x170] sm:$0xff]
    %v2169 = vld [vmem:[#allocation9 + $0x178] sm:$0xff]
    %v2170 = vld [vmem:[#allocation9 + $0x180] sm:$0xff]
    %v2171 = vld [vmem:[#allocation9 + $0x188] sm:$0xff]
    %v2172 = vld [vmem:[#allocation9 + $0x190] sm:$0xff]
    %v2173 = vld [vmem:[#allocation9 + $0x198] sm:$0xff]
    %v2174 = vld [vmem:[#allocation9 + $0x1a0] sm:$0xff]
    %v2175 = vld [vmem:[#allocation9 + $0x1a8] sm:$0xff]
    %v2176 = vld [vmem:[#allocation9 + $0x1b0] sm:$0xff]
    %v2177 = vld [vmem:[#allocation9 + $0x1b8] sm:$0xff]
    %v2178 = vld [vmem:[#allocation9 + $0x1c0] sm:$0xff]
    %v2179 = vld [vmem:[#allocation9 + $0x1c8] sm:$0xff]
    %v2180 = vld [vmem:[#allocation9 + $0x1d0] sm:$0xff]
    %v2181 = vld [vmem:[#allocation9 + $0x1d8] sm:$0xff]
    %v2182 = vld [vmem:[#allocation9 + $0x1e0] sm:$0xff]
    %v2183 = vld [vmem:[#allocation9 + $0x1e8] sm:$0xff]
    %v2184 = vld [vmem:[#allocation9 + $0x1f0] sm:$0xff]
    %v2185 = vld [vmem:[#allocation9 + $0x1f8] sm:$0xff]
    %v2186 = vld [vmem:[%s4] sm:$0x3]
    %v2188 = vperm.slane %v2186, 0
    %v2189 = vperm.slane %v2186, 1
    %v2256 = vunpack.c.l.b16 %v2122
    %v2257 = vunpack.c.h.b16 %v2122
    %v2258 = vunpack.c.l.b16 %v2123
    %v2259 = vunpack.c.h.b16 %v2123
    %v2260 = vunpack.c.l.b16 %v2124
    %v2261 = vunpack.c.h.b16 %v2124
    %v2262 = vunpack.c.l.b16 %v2125
    %v2263 = vunpack.c.h.b16 %v2125
    %v2264 = vunpack.c.l.b16 %v2126
    %v2265 = vunpack.c.h.b16 %v2126
    %v2266 = vunpack.c.l.b16 %v2127
    %v2267 = vunpack.c.h.b16 %v2127
    %v2268 = vunpack.c.l.b16 %v2128
    %v2269 = vunpack.c.h.b16 %v2128
    %v2270 = vunpack.c.l.b16 %v2129
    %v2271 = vunpack.c.h.b16 %v2129
    %v2272 = vunpack.c.l.b16 %v2130
    %v2273 = vunpack.c.h.b16 %v2130
    %v2274 = vunpack.c.l.b16 %v2131
    %v2275 = vunpack.c.h.b16 %v2131
    %v2276 = vunpack.c.l.b16 %v2132
    %v2277 = vunpack.c.h.b16 %v2132
    %v2278 = vunpack.c.l.b16 %v2133
    %v2279 = vunpack.c.h.b16 %v2133
    %v2280 = vunpack.c.l.b16 %v2134
    %v2281 = vunpack.c.h.b16 %v2134
    %v2282 = vunpack.c.l.b16 %v2135
    %v2283 = vunpack.c.h.b16 %v2135
    %v2284 = vunpack.c.l.b16 %v2136
    %v2285 = vunpack.c.h.b16 %v2136
    %v2286 = vunpack.c.l.b16 %v2137
    %v2287 = vunpack.c.h.b16 %v2137
    %v2288 = vunpack.c.l.b16 %v2138
    %v2289 = vunpack.c.h.b16 %v2138
    %v2290 = vunpack.c.l.b16 %v2139
    %v2291 = vunpack.c.h.b16 %v2139
    %v2292 = vunpack.c.l.b16 %v2140
    %v2293 = vunpack.c.h.b16 %v2140
    %v2294 = vunpack.c.l.b16 %v2141
    %v2295 = vunpack.c.h.b16 %v2141
    %v2296 = vunpack.c.l.b16 %v2142
    %v2297 = vunpack.c.h.b16 %v2142
    %v2298 = vunpack.c.l.b16 %v2143
    %v2299 = vunpack.c.h.b16 %v2143
    %v2300 = vunpack.c.l.b16 %v2144
    %v2301 = vunpack.c.h.b16 %v2144
    %v2302 = vunpack.c.l.b16 %v2145
    %v2303 = vunpack.c.h.b16 %v2145
    %v2304 = vunpack.c.l.b16 %v2146
    %v2305 = vunpack.c.h.b16 %v2146
    %v2306 = vunpack.c.l.b16 %v2147
    %v2307 = vunpack.c.h.b16 %v2147
    %v2308 = vunpack.c.l.b16 %v2148
    %v2309 = vunpack.c.h.b16 %v2148
    %v2310 = vunpack.c.l.b16 %v2149
    %v2311 = vunpack.c.h.b16 %v2149
    %v2312 = vunpack.c.l.b16 %v2150
    %v2313 = vunpack.c.h.b16 %v2150
    %v2314 = vunpack.c.l.b16 %v2151
    %v2315 = vunpack.c.h.b16 %v2151
    %v2316 = vunpack.c.l.b16 %v2152
    %v2317 = vunpack.c.h.b16 %v2152
    %v2318 = vunpack.c.l.b16 %v2153
    %v2319 = vunpack.c.h.b16 %v2153
    %v2320 = vunpack.c.l.b16 %v2154
    %v2321 = vunpack.c.h.b16 %v2154
    %v2322 = vunpack.c.l.b16 %v2155
    %v2323 = vunpack.c.h.b16 %v2155
    %v2324 = vunpack.c.l.b16 %v2156
    %v2325 = vunpack.c.h.b16 %v2156
    %v2326 = vunpack.c.l.b16 %v2157
    %v2327 = vunpack.c.h.b16 %v2157
    %v2328 = vunpack.c.l.b16 %v2158
    %v2329 = vunpack.c.h.b16 %v2158
    %v2330 = vunpack.c.l.b16 %v2159
    %v2331 = vunpack.c.h.b16 %v2159
    %v2332 = vunpack.c.l.b16 %v2160
    %v2333 = vunpack.c.h.b16 %v2160
    %v2334 = vunpack.c.l.b16 %v2161
    %v2335 = vunpack.c.h.b16 %v2161
    %v2336 = vunpack.c.l.b16 %v2162
    %v2337 = vunpack.c.h.b16 %v2162
    %v2338 = vunpack.c.l.b16 %v2163
    %v2339 = vunpack.c.h.b16 %v2163
    %v2340 = vunpack.c.l.b16 %v2164
    %v2341 = vunpack.c.h.b16 %v2164
    %v2342 = vunpack.c.l.b16 %v2165
    %v2343 = vunpack.c.h.b16 %v2165
    %v2344 = vunpack.c.l.b16 %v2166
    %v2345 = vunpack.c.h.b16 %v2166
    %v2346 = vunpack.c.l.b16 %v2167
    %v2347 = vunpack.c.h.b16 %v2167
    %v2348 = vunpack.c.l.b16 %v2168
    %v2349 = vunpack.c.h.b16 %v2168
    %v2350 = vunpack.c.l.b16 %v2169
    %v2351 = vunpack.c.h.b16 %v2169
    %v2352 = vunpack.c.l.b16 %v2170
    %v2353 = vunpack.c.h.b16 %v2170
    %v2354 = vunpack.c.l.b16 %v2171
    %v2355 = vunpack.c.h.b16 %v2171
    %v2356 = vunpack.c.l.b16 %v2172
    %v2357 = vunpack.c.h.b16 %v2172
    %v2358 = vunpack.c.l.b16 %v2173
    %v2359 = vunpack.c.h.b16 %v2173
    %v2360 = vunpack.c.l.b16 %v2174
    %v2361 = vunpack.c.h.b16 %v2174
    %v2362 = vunpack.c.l.b16 %v2175
    %v2363 = vunpack.c.h.b16 %v2175
    %v2364 = vunpack.c.l.b16 %v2176
    %v2365 = vunpack.c.h.b16 %v2176
    %v2366 = vunpack.c.l.b16 %v2177
    %v2367 = vunpack.c.h.b16 %v2177
    %v2368 = vunpack.c.l.b16 %v2178
    %v2369 = vunpack.c.h.b16 %v2178
    %v2370 = vunpack.c.l.b16 %v2179
    %v2371 = vunpack.c.h.b16 %v2179
    %v2372 = vunpack.c.l.b16 %v2180
    %v2373 = vunpack.c.h.b16 %v2180
    %v2374 = vunpack.c.l.b16 %v2181
    %v2375 = vunpack.c.h.b16 %v2181
    %v2376 = vunpack.c.l.b16 %v2182
    %v2377 = vunpack.c.h.b16 %v2182
    %v2378 = vunpack.c.l.b16 %v2183
    %v2379 = vunpack.c.h.b16 %v2183
    %v2380 = vunpack.c.l.b16 %v2184
    %v2381 = vunpack.c.h.b16 %v2184
    %v2382 = vunpack.c.l.b16 %v2185
    %v2383 = vunpack.c.h.b16 %v2185
    %v2384 = vpack.c.b16 %v2258, %v2256
    %v2385 = vpack.c.b16 %v2259, %v2257
    %v2386 = vpack.c.b16 %v2262, %v2260
    %v2387 = vpack.c.b16 %v2263, %v2261
    %v2388 = vpack.c.b16 %v2266, %v2264
    %v2389 = vpack.c.b16 %v2267, %v2265
    %v2390 = vpack.c.b16 %v2270, %v2268
    %v2391 = vpack.c.b16 %v2271, %v2269
    %v2392 = vpack.c.b16 %v2274, %v2272
    %v2393 = vpack.c.b16 %v2275, %v2273
    %v2394 = vpack.c.b16 %v2278, %v2276
    %v2395 = vpack.c.b16 %v2279, %v2277
    %v2396 = vpack.c.b16 %v2282, %v2280
    %v2397 = vpack.c.b16 %v2283, %v2281
    %v2398 = vpack.c.b16 %v2286, %v2284
    %v2399 = vpack.c.b16 %v2287, %v2285
    %v2400 = vpack.c.b16 %v2290, %v2288
    %v2401 = vpack.c.b16 %v2291, %v2289
    %v2402 = vpack.c.b16 %v2294, %v2292
    %v2403 = vpack.c.b16 %v2295, %v2293
    %v2404 = vpack.c.b16 %v2298, %v2296
    %v2405 = vpack.c.b16 %v2299, %v2297
    %v2406 = vpack.c.b16 %v2302, %v2300
    %v2407 = vpack.c.b16 %v2303, %v2301
    %v2408 = vpack.c.b16 %v2306, %v2304
    %v2409 = vpack.c.b16 %v2307, %v2305
    %v2410 = vpack.c.b16 %v2310, %v2308
    %v2411 = vpack.c.b16 %v2311, %v2309
    %v2412 = vpack.c.b16 %v2314, %v2312
    %v2413 = vpack.c.b16 %v2315, %v2313
    %v2414 = vpack.c.b16 %v2318, %v2316
    %v2415 = vpack.c.b16 %v2319, %v2317
    %v2416 = vpack.c.b16 %v2322, %v2320
    %v2417 = vpack.c.b16 %v2323, %v2321
    %v2418 = vpack.c.b16 %v2326, %v2324
    %v2419 = vpack.c.b16 %v2327, %v2325
    %v2420 = vpack.c.b16 %v2330, %v2328
    %v2421 = vpack.c.b16 %v2331, %v2329
    %v2422 = vpack.c.b16 %v2334, %v2332
    %v2423 = vpack.c.b16 %v2335, %v2333
    %v2424 = vpack.c.b16 %v2338, %v2336
    %v2425 = vpack.c.b16 %v2339, %v2337
    %v2426 = vpack.c.b16 %v2342, %v2340
    %v2427 = vpack.c.b16 %v2343, %v2341
    %v2428 = vpack.c.b16 %v2346, %v2344
    %v2429 = vpack.c.b16 %v2347, %v2345
    %v2430 = vpack.c.b16 %v2350, %v2348
    %v2431 = vpack.c.b16 %v2351, %v2349
    %v2432 = vpack.c.b16 %v2354, %v2352
    %v2433 = vpack.c.b16 %v2355, %v2353
    %v2434 = vpack.c.b16 %v2358, %v2356
    %v2435 = vpack.c.b16 %v2359, %v2357
    %v2436 = vpack.c.b16 %v2362, %v2360
    %v2437 = vpack.c.b16 %v2363, %v2361
    %v2438 = vpack.c.b16 %v2366, %v2364
    %v2439 = vpack.c.b16 %v2367, %v2365
    %v2440 = vpack.c.b16 %v2370, %v2368
    %v2441 = vpack.c.b16 %v2371, %v2369
    %v2442 = vpack.c.b16 %v2374, %v2372
    %v2443 = vpack.c.b16 %v2375, %v2373
    %v2444 = vpack.c.b16 %v2378, %v2376
    %v2445 = vpack.c.b16 %v2379, %v2377
    %v2446 = vpack.c.b16 %v2382, %v2380
    %v2447 = vpack.c.b16 %v2383, %v2381
    %2512 = vmatpush.bf16.msra.mxu0 %v2398
    %2513 = vmatpush.bf16.msra.mxu0 %v2396
    %2514 = vmatpush.bf16.msra.mxu0 %v2394
    %2515 = vmatpush.bf16.msra.mxu0 %v2392
    %2516 = vmatpush.bf16.msra.mxu0 %v2390
    %2517 = vmatpush.bf16.msra.mxu0 %v2388
    %2518 = vmatpush.bf16.msra.mxu0 %v2386
    %2519 = vmatpush.bf16.msra.mxu0 %v2384
    %2520 = vmatmul.bf16.gmra.mxu0 %v2118
    %v2521 = vpop.f32.mrf.mxu0
    %v2522 = vadd.f32 %v2188, %v2521
    %v2523 = vpop.f32.mrf.mxu0
    %2524 = vdwg.mxu0
    %2525 = vmatpush.bf16.msra.mxu0 %v2414
    %2526 = vmatpush.bf16.msra.mxu0 %v2412
    %2527 = vmatpush.bf16.msra.mxu0 %v2410
    %2528 = vmatpush.bf16.msra.mxu0 %v2408
    %2529 = vmatpush.bf16.msra.mxu0 %v2406
    %2530 = vmatpush.bf16.msra.mxu0 %v2404
    %2531 = vmatpush.bf16.msra.mxu0 %v2402
    %2532 = vmatpush.bf16.msra.mxu0 %v2400
    %2533 = vmatmul.bf16.gmra.mxu0 %v2119
    %v2534 = vpop.f32.mrf.mxu0
    %v2535 = vadd.f32 %v2522, %v2534
    %v2536 = vpop.f32.mrf.mxu0
    %2537 = vdwg.mxu0
    %2538 = vmatpush.bf16.msra.mxu0 %v2430
    %2539 = vmatpush.bf16.msra.mxu0 %v2428
    %2540 = vmatpush.bf16.msra.mxu0 %v2426
    %2541 = vmatpush.bf16.msra.mxu0 %v2424
    %2542 = vmatpush.bf16.msra.mxu0 %v2422
    %2543 = vmatpush.bf16.msra.mxu0 %v2420
    %2544 = vmatpush.bf16.msra.mxu0 %v2418
    %2545 = vmatpush.bf16.msra.mxu0 %v2416
    %2546 = vmatmul.bf16.gmra.mxu0 %v2120
    %v2547 = vpop.f32.mrf.mxu0
    %v2548 = vadd.f32 %v2535, %v2547
    %v2549 = vpop.f32.mrf.mxu0
    %2550 = vdwg.mxu0
    %2551 = vmatpush.bf16.msra.mxu0 %v2446
    %2552 = vmatpush.bf16.msra.mxu0 %v2444
    %2553 = vmatpush.bf16.msra.mxu0 %v2442
    %2554 = vmatpush.bf16.msra.mxu0 %v2440
    %2555 = vmatpush.bf16.msra.mxu0 %v2438
    %2556 = vmatpush.bf16.msra.mxu0 %v2436
    %2557 = vmatpush.bf16.msra.mxu0 %v2434
    %2558 = vmatpush.bf16.msra.mxu0 %v2432
    %2559 = vmatmul.bf16.gmra.mxu0 %v2121
    %v2560 = vpop.f32.mrf.mxu0
    %v2561 = vadd.f32 %v2548, %v2560
    %v2562 = vpop.f32.mrf.mxu0
    %2563 = vdwg.mxu0
    %2564 = vmatpush.bf16.msra.mxu0 %v2399
    %2565 = vmatpush.bf16.msra.mxu0 %v2397
    %2566 = vmatpush.bf16.msra.mxu0 %v2395
    %2567 = vmatpush.bf16.msra.mxu0 %v2393
    %2568 = vmatpush.bf16.msra.mxu0 %v2391
    %2569 = vmatpush.bf16.msra.mxu0 %v2389
    %2570 = vmatpush.bf16.msra.mxu0 %v2387
    %2571 = vmatpush.bf16.msra.mxu0 %v2385
    %2572 = vmatmul.bf16.gmra.mxu0 %v2118
    %v2573 = vpop.f32.mrf.mxu0
    %v2574 = vadd.f32 %v2189, %v2573
    %v2575 = vpop.f32.mrf.mxu0
    %2576 = vdwg.mxu0
    %2577 = vmatpush.bf16.msra.mxu0 %v2415
    %2578 = vmatpush.bf16.msra.mxu0 %v2413
    %2579 = vmatpush.bf16.msra.mxu0 %v2411
    %2580 = vmatpush.bf16.msra.mxu0 %v2409
    %2581 = vmatpush.bf16.msra.mxu0 %v2407
    %2582 = vmatpush.bf16.msra.mxu0 %v2405
    %2583 = vmatpush.bf16.msra.mxu0 %v2403
    %2584 = vmatpush.bf16.msra.mxu0 %v2401
    %2585 = vmatmul.bf16.gmra.mxu0 %v2119
    %v2586 = vpop.f32.mrf.mxu0
    %v2587 = vadd.f32 %v2574, %v2586
    %v2588 = vpop.f32.mrf.mxu0
    %2589 = vdwg.mxu0
    %2590 = vmatpush.bf16.msra.mxu0 %v2431
    %2591 = vmatpush.bf16.msra.mxu0 %v2429
    %2592 = vmatpush.bf16.msra.mxu0 %v2427
    %2593 = vmatpush.bf16.msra.mxu0 %v2425
    %2594 = vmatpush.bf16.msra.mxu0 %v2423
    %2595 = vmatpush.bf16.msra.mxu0 %v2421
    %2596 = vmatpush.bf16.msra.mxu0 %v2419
    %2597 = vmatpush.bf16.msra.mxu0 %v2417
    %2598 = vmatmul.bf16.gmra.mxu0 %v2120
    %v2599 = vpop.f32.mrf.mxu0
    %v2600 = vadd.f32 %v2587, %v2599
    %v2601 = vpop.f32.mrf.mxu0
    %2602 = vdwg.mxu0
    %2603 = vmatpush.bf16.msra.mxu0 %v2447
    %2604 = vmatpush.bf16.msra.mxu0 %v2445
    %2605 = vmatpush.bf16.msra.mxu0 %v2443
    %2606 = vmatpush.bf16.msra.mxu0 %v2441
    %2607 = vmatpush.bf16.msra.mxu0 %v2439
    %2608 = vmatpush.bf16.msra.mxu0 %v2437
    %2609 = vmatpush.bf16.msra.mxu0 %v2435
    %2610 = vmatpush.bf16.msra.mxu0 %v2433
    %2611 = vmatmul.bf16.gmra.mxu0 %v2121
    %v2612 = vpop.f32.mrf.mxu0
    %v2613 = vadd.f32 %v2600, %v2612
    %v2614 = vpop.f32.mrf.mxu0
    %2615 = vdwg.mxu0
    %vm2616 = vcmp.gt.f32.partialorder %v2561, 0.0
    %vm2617 = vcmp.gt.f32.partialorder %v2613, 0.0
    %v2618 = vmul.f32 %v2561, 0.2
    %v2619 = vmul.f32 %v2613, 0.2
    %v2620 = vsel %vm2616, %v2561, %v2618
    %v2621 = vsel %vm2617, %v2613, %v2619
    %v2622 = vld [vmem:[%s5] sm:$0x3]
    %v2623 = vunpack.c.l.bf16 %v2622
    %v2625 = vperm.slane %v2623, 0
    %v2626 = vperm.slane %v2623, 2
    %v2629 = vperm.slane %v2625, 0
    %v2630 = vperm.slane %v2626, 0
    %v2631 = vmul.f32 %v2620, %v2629
    %v2632 = vmul.f32 %v2621, %v2630
    %v2633 = vadd.f32 %v2631, %v2632
    %2634 = vadd.xlane.f32.xlu0 %v2633
    %v2635 = vpop.xlane.xlu0 %2634
    %s2636 = sld [smem:[#allocation2]]
    %v2637 = vstv %s2636
    %v2638 = vadd.f32 %v2635, %v2637
    %v2640 = vlaneseq
    %v2641 = vand.u32 %v2640, 127
    %v2642 = vperm.slane %v2638, %v2641
    %vm2644 = vcmask 57344
    %2645 = vst.msk [vmem:[#allocation11] sm:$0x1] %vm2644, %v2642
    // Predicated region
    $region46: #{tpu_custom_call.1} parent=1 // pred_check
      _
    $region47: #{tpu_custom_call.1} parent=1 // pred_check_branch
      %2647 = sbr.rel (0) target = $region49
    $region48: #{tpu_custom_call.1} parent=1 // pred_region
      %2649 = vsyncadd [#allocation5], 0
      %s2651 = sshll.u32 [#allocation11], 4
      %s2652 = int_to_ptr.vmem [resolvable:$true] %s2651
      %s2653 = sshll.u32 %s7, 4
      %s2654 = int_to_ptr.hbm [resolvable:$true] %s2653
      %2656 = dma.vmem_to_hbm [thread:$0]  %s2652, 16, %s2654, [#allocation5]
    $region49: #{tpu_custom_call.1} parent=1 // pred_fallthru
      _
    // Predicated region
    $region50: #{tpu_custom_call.1} parent=1 // pred_check
      _
    $region51: #{tpu_custom_call.1} parent=1 // pred_check_branch
      %2658 = sbr.rel (0) target = $region53
    $region52: #{tpu_custom_call.1} parent=1 // pred_region
      %2660 = dma.done [#allocation5], 16
    $region53: #{tpu_custom_call.1} parent=1 // pred_fallthru
      _
    %2661 = vsyncpa [#allocation4], 1
    %2662 = vsyncpa [#allocation7], 1
    %2663 = vsyncpa [#allocation10], 1
    %2664 = vsyncpa [#allocation5], 1

</llo_original>
